<compile_context>
chip_gen: v6e
topology: v6e:2x2x1
jax: 0.10.0
libtpu: 0.0.40
codegen_flags: <defaults>
</compile_context>

<pallas_src>
import jax
import jax.numpy as jnp
from jax.experimental import pallas as pl
from jax.experimental.pallas import tpu as pltpu


def _round_up(x: int, n: int) -> int:
    return ((x + n - 1) // n) * n


def _device_kind() -> str:
    try:
        return jax.devices()[0].device_kind.lower()
    except Exception:
        return ""


def _pick_group(m: int, g_pref: int) -> int:
    """Largest power-of-two packing factor <= g_pref that divides m."""
    g = g_pref
    while g > 1 and (m % g) != 0:
        g //= 2
    return max(g, 1)


def offset_predictor_kernel(x_ref, w1_ref, b1_ref, w2_ref, b2_ref, o_ref):
    # x_ref:  (TM, G*C_in)   input rows, original dtype (f32 or bf16)
    # w1_ref: (G*C_in, G*H)  block-diagonal first-layer weight, bf16
    # b1_ref: (1, G*H)       tiled first-layer bias, f32
    # w2_ref: (G*H, G*OUT)   block-diagonal second-layer weight, bf16
    # b2_ref: (1, G*OUT)     tiled second-layer bias, f32
    # o_ref:  (TM, G*OUT)    output tile, original dtype
    x = x_ref[...].astype(w1_ref.dtype)          # f32 -> bf16 on the VPU (no extra HBM pass)
    h = jnp.dot(x, w1_ref[...], preferred_element_type=jnp.float32)
    h = jnp.maximum(h + b1_ref[...], 0.0)        # bias + ReLU in f32 (VPU)
    y = jnp.dot(h.astype(w2_ref.dtype), w2_ref[...],
                preferred_element_type=jnp.float32) + b2_ref[...]
    o_ref[...] = (jnp.tanh(y) * 0.1).astype(o_ref.dtype)   # Tanh (EUP) + scale


def offset_predictor(x, w1, b1, w2, b2, *, rows_per_step=16384,
                     compute_dtype=jnp.bfloat16, out_dtype=None):
    """x: (..., C_in) -> (..., OUT), matching PyTorch OffsetPredictor.forward."""
    orig_shape = x.shape
    c_in = orig_shape[-1]
    hidden = w1.shape[1]
    out_dim = w2.shape[1]
    out_dtype = x.dtype if out_dtype is None else out_dtype

    x2d = x.reshape(-1, c_in)                    # no dtype cast here (kernel casts on VPU)
    m = x2d.shape[0]

    kind = _device_kind()
    is_v5e = ("v5 lite" in kind) or ("v5e" in kind) or ("v5litepod" in kind)
    is_v7x = "v7" in kind

    # Packing factor: G=16 -> output 384 = 3x128 lanes (unmasked stores);
    # G=8 on v5e stays memory-bound despite the G^2 flop inflation.
    g = _pick_group(m, 8 if is_v5e else 16)
    m_packed = m // g
    xp = x2d.reshape(m_packed, g * c_in)         # zero-copy row-major bitcast

    # Block-diagonal weights / tiled biases (tiny; bf16 into the MXU, f32 biases).
    eye = jnp.eye(g, dtype=jnp.float32)
    w1_bd = jnp.kron(eye, w1.astype(jnp.float32)).astype(compute_dtype)
    w2_bd = jnp.kron(eye, w2.astype(jnp.float32)).astype(compute_dtype)
    b1_bd = jnp.tile(b1.astype(jnp.float32).reshape(-1), g).reshape(1, g * hidden)
    b2_bd = jnp.tile(b2.astype(jnp.float32).reshape(-1), g).reshape(1, g * out_dim)

    # Row tile (in packed rows): target rows_per_step original rows per grid step.
    tile = max(16, _round_up(rows_per_step // g, 16))
    if is_v7x:
        # 2 TensorCores: keep >= 4 grid steps (>= 2 per core) when M allows.
        tile = min(tile, max(16, _round_up(pl.cdiv(m_packed, 4), 16)))

    # VMEM cap, lane-padding aware (blocks are padded to 128 lanes in VMEM).
    x_isz = jnp.dtype(x.dtype).itemsize
    o_isz = jnp.dtype(out_dtype).itemsize
    w_isz = jnp.dtype(compute_dtype).itemsize
    lanes = lambda n: _round_up(n, 128)
    bytes_per_row = (
        2 * lanes(g * c_in) * x_isz              # x block (double-buffered)
        + 2 * lanes(g * out_dim) * o_isz         # out block (double-buffered)
        + lanes(g * c_in) * w_isz                # bf16 copy of x
        + 2 * lanes(g * hidden) * 4              # h (f32) + 2nd-matmul accumulator
        + lanes(g * hidden) * w_isz              # bf16 copy of h
        + lanes(g * out_dim) * 4                 # tanh temporary
    )
    vmem_row_budget = 20 * 1024 * 1024           # headroom under the 32 MiB scoped limit
    tile = min(tile, max(16, (vmem_row_budget // bytes_per_row) // 16 * 16))
    tile = min(tile, _round_up(max(m_packed, 1), 16))

    grid = pl.cdiv(m_packed, tile)               # ragged last block; OOB stores masked

    cost = pl.CostEstimate(
        flops=int(2 * m_packed * ((g * c_in) * (g * hidden)
                                  + (g * hidden) * (g * out_dim))),
        transcendentals=int(m * out_dim),
        bytes_accessed=int(
            m * c_in * x_isz                                  # x
            + m * out_dim * o_isz                             # output
            + (g * c_in * g * hidden + g * hidden * g * out_dim) * w_isz   # weights
            + g * (hidden + out_dim) * 4                      # biases
        ),
    )

    out_p = pl.pallas_call(
        offset_predictor_kernel,
        out_shape=jax.ShapeDtypeStruct((m_packed, g * out_dim), out_dtype),
        grid_spec=pltpu.PrefetchScalarGridSpec(
            num_scalar_prefetch=0,
            grid=(grid,),
            in_specs=[
                pl.BlockSpec((tile, g * c_in), lambda i: (i, 0)),
                pl.BlockSpec((g * c_in, g * hidden), lambda i: (0, 0)),
                pl.BlockSpec((1, g * hidden), lambda i: (0, 0)),
                pl.BlockSpec((g * hidden, g * out_dim), lambda i: (0, 0)),
                pl.BlockSpec((1, g * out_dim), lambda i: (0, 0)),
            ],
            out_specs=pl.BlockSpec((tile, g * out_dim), lambda i: (i, 0)),
        ),
        compiler_params=pltpu.CompilerParams(
            dimension_semantics=("parallel",),
            vmem_limit_bytes=32 * 1024 * 1024,
        ),
        cost_estimate=cost,
    )(xp, w1_bd, b1_bd, w2_bd, b2_bd)

    # Zero-copy unpack back to (..., OUT).
    return out_p.reshape(*orig_shape[:-1], out_dim)


if __name__ == "__main__":
    key = jax.random.PRNGKey(0)
    k_x, k_w1, k_b1, k_w2, k_b2 = jax.random.split(key, 5)

    # Small shapes consistent with the module: batch=2, points=64, in_channels=16,
    # hidden_dim=64 (OffsetPredictor default), out=24.
    B, N, C_IN, HIDDEN, OUT = 2, 64, 16, 64, 24

    x = jax.random.normal(k_x, (B, N, C_IN), dtype=jnp.float32)

    # Deterministic parameter init (PyTorch-Linear-like uniform bounds).
    bound1 = 1.0 / (C_IN ** 0.5)
    w1 = jax.random.uniform(k_w1, (C_IN, HIDDEN), jnp.float32, -bound1, bound1)
    b1 = jax.random.uniform(k_b1, (HIDDEN,), jnp.float32, -bound1, bound1)
    bound2 = 1.0 / (HIDDEN ** 0.5)
    w2 = jax.random.uniform(k_w2, (HIDDEN, OUT), jnp.float32, -bound2, bound2)
    b2 = jax.random.uniform(k_b2, (OUT,), jnp.float32, -bound2, bound2)

    op = jax.jit(offset_predictor)   # jit so the pack/unpack reshapes stay bitcasts

    out = jax.block_until_ready(op(x, w1, b1, w2, b2))
    assert out.shape == (B, N, OUT)
    assert out.dtype == x.dtype

    # Reference 1: pure-f32 PyTorch math (loose tolerance for the bf16 compute path).
    ref_f32 = jnp.tanh(jnp.maximum(x @ w1 + b1, 0.0) @ w2 + b2) * 0.1
    assert jnp.allclose(out, ref_f32, atol=5e-3), float(jnp.max(jnp.abs(out - ref_f32)))

    # Reference 2: mirror the kernel's dtypes (bf16 operands, f32 accumulation).
    xb = x.reshape(-1, C_IN).astype(jnp.bfloat16)
    h = jnp.maximum(jnp.dot(xb, w1.astype(jnp.bfloat16),
                            preferred_element_type=jnp.float32) + b1, 0.0)
    yr = jnp.dot(h.astype(jnp.bfloat16), w2.astype(jnp.bfloat16),
                 preferred_element_type=jnp.float32) + b2
    ref_bf16 = (jnp.tanh(yr) * 0.1).astype(x.dtype).reshape(B, N, OUT)
    assert jnp.allclose(out, ref_bf16, atol=2e-4, rtol=2e-4)

    # Non-power-of-two M: exercises the smaller packing factor (G=2) + ragged block.
    x_odd = jax.random.normal(k_x, (1, 50, C_IN), dtype=jnp.float32)
    out_odd = jax.block_until_ready(op(x_odd, w1, b1, w2, b2))
    ref_odd = jnp.tanh(jnp.maximum(x_odd @ w1 + b1, 0.0) @ w2 + b2) * 0.1
    assert out_odd.shape == (1, 50, OUT)
    assert jnp.allclose(out_odd, ref_odd, atol=5e-3)

    # Prime M: exercises the G=1 fallback (narrow-lane path).
    x_prime = jax.random.normal(k_x, (1, 37, C_IN), dtype=jnp.float32)
    out_prime = jax.block_until_ready(op(x_prime, w1, b1, w2, b2))
    ref_prime = jnp.tanh(jnp.maximum(x_prime @ w1 + b1, 0.0) @ w2 + b2) * 0.1
    assert out_prime.shape == (1, 37, OUT)
    assert jnp.allclose(out_prime, ref_prime, atol=5e-3)

    print("KERNEL_OK")
</pallas_src>

<mosaic_0001>
module attributes {stable_mosaic.version = 11 : i64} {
  func.func @offset_predictor_kernel(%arg0: i32, %arg1: memref<16x256xf32, #tpu.memory_space<vmem>>, %arg2: memref<256x1024xbf16, #tpu.memory_space<vmem>>, %arg3: memref<1x1024xf32, #tpu.memory_space<vmem>>, %arg4: memref<1024x384xbf16, #tpu.memory_space<vmem>>, %arg5: memref<1x384xf32, #tpu.memory_space<vmem>>, %arg6: memref<16x384xf32, #tpu.memory_space<vmem>>) attributes {dimension_semantics = [#tpu.dimension_semantics<parallel>], iteration_bounds = array<i64: 1>, scalar_prefetch = 0 : i64, scratch_operands = 0 : i64, tpu.core_type = #tpu.core_type<tc>, window_params = [{transform_indices = @transform_0, window_bounds = array<i64: 16, 256>}, {pipeline_mode = #tpu.pipeline_mode<synchronous>, transform_indices = @transform_1, window_bounds = array<i64: 256, 1024>}, {pipeline_mode = #tpu.pipeline_mode<synchronous>, transform_indices = @transform_2, window_bounds = array<i64: 1, 1024>}, {pipeline_mode = #tpu.pipeline_mode<synchronous>, transform_indices = @transform_3, window_bounds = array<i64: 1024, 384>}, {pipeline_mode = #tpu.pipeline_mode<synchronous>, transform_indices = @transform_4, window_bounds = array<i64: 1, 384>}, {transform_indices = @transform_5, window_bounds = array<i64: 16, 384>}]} {
    %c0 = arith.constant 0 : index
    %c0_0 = arith.constant 0 : index
    %0 = vector.load %arg1[%c0, %c0_0] : memref<16x256xf32, #tpu.memory_space<vmem>>, vector<16x256xf32>
    %1 = arith.truncf %0 : vector<16x256xf32> to vector<16x256xbf16>
    %c0_1 = arith.constant 0 : index
    %c0_2 = arith.constant 0 : index
    %2 = vector.load %arg2[%c0_1, %c0_2] : memref<256x1024xbf16, #tpu.memory_space<vmem>>, vector<256x1024xbf16>
    %cst = arith.constant dense<0.000000e+00> : vector<16x1024xf32>
    %3 = tpu.matmul %1, %2, %cst {dimension_numbers = #tpu.dot_dimension_numbers<[1], [0], [0], [1], [0, 0, 1, 1], [], []>} : vector<16x256xbf16>, vector<256x1024xbf16>, vector<16x1024xf32> -> vector<16x1024xf32>
    %c0_3 = arith.constant 0 : index
    %c0_4 = arith.constant 0 : index
    %4 = vector.load %arg3[%c0_3, %c0_4] : memref<1x1024xf32, #tpu.memory_space<vmem>>, vector<1x1024xf32>
    %5 = vector.broadcast %4 : vector<1x1024xf32> to vector<16x1024xf32>
    %6 = arith.addf %3, %5 : vector<16x1024xf32>
    %cst_5 = arith.constant 0.000000e+00 : f32
    %7 = vector.broadcast %cst_5 : f32 to vector<16x1024xf32>
    %8 = arith.maximumf %6, %7 : vector<16x1024xf32>
    %9 = arith.truncf %8 : vector<16x1024xf32> to vector<16x1024xbf16>
    %c0_6 = arith.constant 0 : index
    %c0_7 = arith.constant 0 : index
    %10 = vector.load %arg4[%c0_6, %c0_7] : memref<1024x384xbf16, #tpu.memory_space<vmem>>, vector<1024x384xbf16>
    %cst_8 = arith.constant dense<0.000000e+00> : vector<16x384xf32>
    %11 = tpu.matmul %9, %10, %cst_8 {dimension_numbers = #tpu.dot_dimension_numbers<[1], [0], [0], [1], [0, 0, 1, 1], [], []>} : vector<16x1024xbf16>, vector<1024x384xbf16>, vector<16x384xf32> -> vector<16x384xf32>
    %c0_9 = arith.constant 0 : index
    %c0_10 = arith.constant 0 : index
    %12 = vector.load %arg5[%c0_9, %c0_10] : memref<1x384xf32, #tpu.memory_space<vmem>>, vector<1x384xf32>
    %13 = vector.broadcast %12 : vector<1x384xf32> to vector<16x384xf32>
    %14 = arith.addf %11, %13 : vector<16x384xf32>
    %15 = math.tanh %14 : vector<16x384xf32>
    %cst_11 = arith.constant 1.000000e-01 : f32
    %16 = vector.broadcast %cst_11 : f32 to vector<16x384xf32>
    %17 = arith.mulf %15, %16 : vector<16x384xf32>
    %c0_12 = arith.constant 0 : index
    %c0_13 = arith.constant 0 : index
    %18 = vector.load %arg6[%c0_12, %c0_13] : memref<16x384xf32, #tpu.memory_space<vmem>>, vector<16x384xf32>
    tpu.vector_store %arg6[%c0_12, %c0_13], %17 {strides = array<i32>} : memref<16x384xf32, #tpu.memory_space<vmem>>, vector<16x384xf32>,
    return
  }
  func.func @transform_0(%arg0: i32) -> (i32, i32) {
    %c0_i32 = arith.constant 0 : i32
    %c0_i32_0 = arith.constant 0 : i32
    return %arg0, %c0_i32 : i32, i32
  }
  func.func @transform_1(%arg0: i32) -> (i32, i32) {
    %c0_i32 = arith.constant 0 : i32
    %c0_i32_0 = arith.constant 0 : i32
    %c0_i32_1 = arith.constant 0 : i32
    return %c0_i32, %c0_i32_0 : i32, i32
  }
  func.func @transform_2(%arg0: i32) -> (i32, i32) {
    %c0_i32 = arith.constant 0 : i32
    %c0_i32_0 = arith.constant 0 : i32
    %c0_i32_1 = arith.constant 0 : i32
    return %c0_i32, %c0_i32_0 : i32, i32
  }
  func.func @transform_3(%arg0: i32) -> (i32, i32) {
    %c0_i32 = arith.constant 0 : i32
    %c0_i32_0 = arith.constant 0 : i32
    %c0_i32_1 = arith.constant 0 : i32
    return %c0_i32, %c0_i32_0 : i32, i32
  }
  func.func @transform_4(%arg0: i32) -> (i32, i32) {
    %c0_i32 = arith.constant 0 : i32
    %c0_i32_0 = arith.constant 0 : i32
    %c0_i32_1 = arith.constant 0 : i32
    return %c0_i32, %c0_i32_0 : i32, i32
  }
  func.func @transform_5(%arg0: i32) -> (i32, i32) {
    %c0_i32 = arith.constant 0 : i32
    %c0_i32_0 = arith.constant 0 : i32
    return %arg0, %c0_i32 : i32, i32
  }
}

</mosaic_0001>

<llo_original>
// kernel: tile.13
$region0: #{tile.13}
  #allocation0 [shape = 's32[1]{0}', space=sflag, size = 0x4, scoped, tag = 'scoped memory for tile.13']
  %s0 = inlined_call_operand.vmem [shape: f32[64], index: 0, kind: input, shape index: {}]
  %s1 = inlined_call_operand.vmem [shape: f32[16,64], index: 1, kind: output, shape index: {}]
  // Predicated region
  $region2: #{tile.13} parent=0 // pred_check
    _
  $region3: #{tile.13} parent=0 // pred_check_branch
    %3 = sbr.rel (0) target = $region5
  $region4: #{tile.13} parent=0 // pred_region
    _
  $region5: #{tile.13} parent=0 // pred_fallthru
    _
  %v4 = vld [vmem:[%s0] ss:$0 sm:$0xff]
  %5 = vst [vmem:[%s1] sm:$0xff] %v4
  %s6 = scalar_lea.vmem %s1, 8
  %7 = vst [vmem:[%s6] sm:$0xff] %v4

// kernel: tile.14
$region0: #{tile.14}
  %s0 = inlined_call_operand.vmem [shape: f32[16,64], index: 0, kind: input, shape index: {}]
  %s1 = inlined_call_operand.vmem [shape: f32[1,1024], index: 1, kind: output, shape index: {}]
  $region1: #{tile.14} parent=0
    #allocation0 [shape = 'u8[32768]{0}', space=vmem, size = 0x8000, scoped, tag = 'scoped mem for output reshape']
    %v2 = vld [vmem:[%s0] ss:$2 sm:$0xff]
    %vm3 = vcmask 523264
    %4 = vst.msk [vmem:[#allocation0] ss:$8 sm:$0xf] %vm3, %v2
    %5 = vst.msk [vmem:[#allocation0] ss:$8 sm:$0xf0] %vm3, %v2
    %s6 = scalar_lea.vmem %s0, 1
    %v7 = vld [vmem:[%s6] ss:$2 sm:$0xff]
    %8 = vrot.lane.b32.xlu0 %v7, 64
    %v9 = vpop.permute.xlu0 %8
    %vm10 = vcmask 1048064
    %11 = vst.msk [vmem:[#allocation0] ss:$8 sm:$0xf] %vm10, %v9
    %12 = vst.msk [vmem:[#allocation0] ss:$8 sm:$0xf0] %vm10, %v9
    %s14 = sshll.u32 1, 1
    %s15 = ssub.s32 %s14, 1
    %v17 = vld [vmem:[#allocation0] sm:%s15]
    %s18 = sshll.u32 1, 1
    %s19 = ssub.s32 %s18, 1
    %20 = vst [vmem:[%s1] sm:%s19] %v17
    %s21 = scalar_lea.vmem [#allocation0], 8
    %v22 = vld [vmem:[%s21] sm:%s15]
    %s23 = sshll.u32 1, 1
    %s24 = ssub.s32 %s23, 1
    %s25 = scalar_lea.vmem %s1, 1
    %26 = vst [vmem:[%s25] sm:%s24] %v22
    %s27 = scalar_lea.vmem [#allocation0], 16
    %v28 = vld [vmem:[%s27] sm:%s15]
    %s29 = sshll.u32 1, 1
    %s30 = ssub.s32 %s29, 1
    %s31 = smul.addr 1, 2
    %s32 = scalar_lea.vmem %s1, %s31
    %33 = vst [vmem:[%s32] sm:%s30] %v28
    %s34 = scalar_lea.vmem [#allocation0], 24
    %v35 = vld [vmem:[%s34] sm:%s15]
    %s36 = sshll.u32 1, 1
    %s37 = ssub.s32 %s36, 1
    %s38 = smul.addr 1, 3
    %s39 = scalar_lea.vmem %s1, %s38
    %40 = vst [vmem:[%s39] sm:%s37] %v35
    %s41 = scalar_lea.vmem [#allocation0], 32
    %v42 = vld [vmem:[%s41] sm:%s15]
    %s43 = sshll.u32 1, 1
    %s44 = ssub.s32 %s43, 1
    %s45 = smul.addr 1, 4
    %s46 = scalar_lea.vmem %s1, %s45
    %47 = vst [vmem:[%s46] sm:%s44] %v42
    %s48 = scalar_lea.vmem [#allocation0], 40
    %v49 = vld [vmem:[%s48] sm:%s15]
    %s50 = sshll.u32 1, 1
    %s51 = ssub.s32 %s50, 1
    %s52 = smul.addr 1, 5
    %s53 = scalar_lea.vmem %s1, %s52
    %54 = vst [vmem:[%s53] sm:%s51] %v49
    %s55 = scalar_lea.vmem [#allocation0], 48
    %v56 = vld [vmem:[%s55] sm:%s15]
    %s57 = sshll.u32 1, 1
    %s58 = ssub.s32 %s57, 1
    %s59 = smul.addr 1, 6
    %s60 = scalar_lea.vmem %s1, %s59
    %61 = vst [vmem:[%s60] sm:%s58] %v56
    %s62 = scalar_lea.vmem [#allocation0], 56
    %v63 = vld [vmem:[%s62] sm:%s15]
    %s64 = sshll.u32 1, 1
    %s65 = ssub.s32 %s64, 1
    %s66 = smul.addr 1, 7
    %s67 = scalar_lea.vmem %s1, %s66
    %68 = vst [vmem:[%s67] sm:%s65] %v63

// kernel: tile.18
$region0: #{tile.18}
  #allocation0 [shape = 's32[1]{0}', space=sflag, size = 0x4, scoped, tag = 'scoped memory for tile.18']
  %s0 = inlined_call_operand.vmem [shape: f32[24], index: 0, kind: input, shape index: {}]
  %s1 = inlined_call_operand.vmem [shape: f32[16,24], index: 1, kind: output, shape index: {}]
  // Predicated region
  $region2: #{tile.18} parent=0 // pred_check
    _
  $region3: #{tile.18} parent=0 // pred_check_branch
    %3 = sbr.rel (0) target = $region5
  $region4: #{tile.18} parent=0 // pred_region
    _
  $region5: #{tile.18} parent=0 // pred_fallthru
    _
  %v4 = vld [vmem:[%s0] ss:$0 sm:$0xff]
  %5 = vst [vmem:[%s1] sm:$0xff] %v4
  %s6 = scalar_lea.vmem %s1, 8
  %7 = vst [vmem:[%s6] sm:$0xff] %v4

// kernel: tile.19
$region0: #{tile.19}
  %s0 = inlined_call_operand.vmem [shape: f32[16,24], index: 0, kind: input, shape index: {}]
  %s1 = inlined_call_operand.vmem [shape: f32[1,384], index: 1, kind: output, shape index: {}]
  $region1: #{tile.19} parent=0
    #allocation0 [shape = 'u8[12288]{0}', space=vmem, size = 0x3000, scoped, tag = 'scoped mem for output reshape']
    %v2 = vld [vmem:[%s0] sm:$0x1]
    %vm3 = vcmask 195584
    %4 = vst.msk [vmem:[#allocation0] sm:$0x1] %vm3, %v2
    %s5 = scalar_lea.vmem %s0, 5
    %v6 = vld [vmem:[%s5] sm:$0x1]
    %s7 = scalar_lea.vmem %s0, 5
    %v8 = vld [vmem:[%s7] sm:$0x1]
    %vm9 = vcmask 64512
    %v10 = vsel %vm9, %v8, %v6
    %11 = vrot.lane.b32.xlu0 %v10, 120
    %v12 = vpop.permute.xlu0 %11
    %vm13 = vcmask 130048
    %s14 = scalar_lea.vmem [#allocation0], 8
    %15 = vst.msk [vmem:[%s14] sm:$0x1] %vm13, %v12
    %vm16 = vcmask 1048512
    %17 = vst.msk [vmem:[#allocation0] sm:$0x1] %vm16, %v12
    %s18 = scalar_lea.vmem %s0, 10
    %v19 = vld [vmem:[%s18] sm:$0x1]
    %s20 = scalar_lea.vmem %s0, 10
    %v21 = vld [vmem:[%s20] sm:$0x1]
    %vm22 = vcmask 130048
    %v23 = vsel %vm22, %v21, %v19
    %24 = vrot.lane.b32.xlu0 %v23, 112
    %v25 = vpop.permute.xlu0 %24
    %vm26 = vcmask 64512
    %s27 = scalar_lea.vmem [#allocation0], 16
    %28 = vst.msk [vmem:[%s27] sm:$0x1] %vm26, %v25
    %vm29 = vcmask 1048448
    %s30 = scalar_lea.vmem [#allocation0], 8
    %31 = vst.msk [vmem:[%s30] sm:$0x1] %vm29, %v25
    %s32 = scalar_lea.vmem %s0, 15
    %v33 = vld [vmem:[%s32] sm:$0x1]
    %34 = vrot.lane.b32.xlu0 %v33, 104
    %v35 = vpop.permute.xlu0 %34
    %vm36 = vcmask 1048384
    %s37 = scalar_lea.vmem [#allocation0], 16
    %38 = vst.msk [vmem:[%s37] sm:$0x1] %vm36, %v35
    %s39 = scalar_lea.vmem %s0, 4
    %v40 = vld [vmem:[%s39] sm:$0x1]
    %41 = vrot.lane.b32.xlu0 %v40, 96
    %v42 = vpop.permute.xlu0 %41
    %vm43 = vcmask 982784
    %44 = vst.msk [vmem:[#allocation0] sm:$0x1] %vm43, %v42
    %s45 = scalar_lea.vmem %s0, 9
    %v46 = vld [vmem:[%s45] sm:$0x1]
    %47 = vrot.lane.b32.xlu0 %v46, 88
    %v48 = vpop.permute.xlu0 %47
    %vm49 = vcmask 917184
    %s50 = scalar_lea.vmem [#allocation0], 8
    %51 = vst.msk [vmem:[%s50] sm:$0x1] %vm49, %v48
    %s52 = scalar_lea.vmem %s0, 14
    %v53 = vld [vmem:[%s52] sm:$0x1]
    %54 = vrot.lane.b32.xlu0 %v53, 80
    %v55 = vpop.permute.xlu0 %54
    %vm56 = vcmask 851584
    %s57 = scalar_lea.vmem [#allocation0], 16
    %58 = vst.msk [vmem:[%s57] sm:$0x1] %vm56, %v55
    %s59 = scalar_lea.vmem %s0, 3
    %v60 = vld [vmem:[%s59] sm:$0x1]
    %61 = vrot.lane.b32.xlu0 %v60, 72
    %v62 = vpop.permute.xlu0 %61
    %vm63 = vcmask 785984
    %64 = vst.msk [vmem:[#allocation0] sm:$0x1] %vm63, %v62
    %s65 = scalar_lea.vmem %s0, 8
    %v66 = vld [vmem:[%s65] sm:$0x1]
    %67 = vrot.lane.b32.xlu0 %v66, 64
    %v68 = vpop.permute.xlu0 %67
    %vm69 = vcmask 720384
    %s70 = scalar_lea.vmem [#allocation0], 8
    %71 = vst.msk [vmem:[%s70] sm:$0x1] %vm69, %v68
    %s72 = scalar_lea.vmem %s0, 13
    %v73 = vld [vmem:[%s72] sm:$0x1]
    %74 = vrot.lane.b32.xlu0 %v73, 56
    %v75 = vpop.permute.xlu0 %74
    %vm76 = vcmask 654784
    %s77 = scalar_lea.vmem [#allocation0], 16
    %78 = vst.msk [vmem:[%s77] sm:$0x1] %vm76, %v75
    %s79 = scalar_lea.vmem %s0, 2
    %v80 = vld [vmem:[%s79] sm:$0x1]
    %81 = vrot.lane.b32.xlu0 %v80, 48
    %v82 = vpop.permute.xlu0 %81
    %vm83 = vcmask 589184
    %84 = vst.msk [vmem:[#allocation0] sm:$0x1] %vm83, %v82
    %s85 = scalar_lea.vmem %s0, 7
    %v86 = vld [vmem:[%s85] sm:$0x1]
    %87 = vrot.lane.b32.xlu0 %v86, 40
    %v88 = vpop.permute.xlu0 %87
    %vm89 = vcmask 523584
    %s90 = scalar_lea.vmem [#allocation0], 8
    %91 = vst.msk [vmem:[%s90] sm:$0x1] %vm89, %v88
    %s92 = scalar_lea.vmem %s0, 12
    %v93 = vld [vmem:[%s92] sm:$0x1]
    %94 = vrot.lane.b32.xlu0 %v93, 32
    %v95 = vpop.permute.xlu0 %94
    %vm96 = vcmask 457984
    %s97 = scalar_lea.vmem [#allocation0], 16
    %98 = vst.msk [vmem:[%s97] sm:$0x1] %vm96, %v95
    %s99 = scalar_lea.vmem %s0, 1
    %v100 = vld [vmem:[%s99] sm:$0x1]
    %101 = vrot.lane.b32.xlu0 %v100, 24
    %v102 = vpop.permute.xlu0 %101
    %vm103 = vcmask 392384
    %104 = vst.msk [vmem:[#allocation0] sm:$0x1] %vm103, %v102
    %s105 = scalar_lea.vmem %s0, 6
    %v106 = vld [vmem:[%s105] sm:$0x1]
    %107 = vrot.lane.b32.xlu0 %v106, 16
    %v108 = vpop.permute.xlu0 %107
    %vm109 = vcmask 326784
    %s110 = scalar_lea.vmem [#allocation0], 8
    %111 = vst.msk [vmem:[%s110] sm:$0x1] %vm109, %v108
    %s112 = scalar_lea.vmem %s0, 11
    %v113 = vld [vmem:[%s112] sm:$0x1]
    %114 = vrot.lane.b32.xlu0 %v113, 8
    %v115 = vpop.permute.xlu0 %114
    %vm116 = vcmask 261184
    %s117 = scalar_lea.vmem [#allocation0], 16
    %118 = vst.msk [vmem:[%s117] sm:$0x1] %vm116, %v115
    %s120 = sshll.u32 1, 1
    %s121 = ssub.s32 %s120, 1
    %v123 = vld [vmem:[#allocation0] sm:%s121]
    %s124 = sshll.u32 1, 1
    %s125 = ssub.s32 %s124, 1
    %126 = vst [vmem:[%s1] sm:%s125] %v123
    %s127 = scalar_lea.vmem [#allocation0], 8
    %v128 = vld [vmem:[%s127] sm:%s121]
    %s129 = sshll.u32 1, 1
    %s130 = ssub.s32 %s129, 1
    %s131 = scalar_lea.vmem %s1, 1
    %132 = vst [vmem:[%s131] sm:%s130] %v128
    %s133 = scalar_lea.vmem [#allocation0], 16
    %v134 = vld [vmem:[%s133] sm:%s121]
    %s135 = sshll.u32 1, 1
    %s136 = ssub.s32 %s135, 1
    %s137 = smul.addr 1, 2
    %s138 = scalar_lea.vmem %s1, %s137
    %139 = vst [vmem:[%s138] sm:%s136] %v134

// kernel: offset_predictor.1
$region0: #{offset_predictor.1}
  #allocation0 [shape = 'u32[]', space=smem, size = 0x4, offset = 0x4, fixed_abs, tag = 'smem constant byte address 0x4 - core index']
  #allocation1 [shape = 'u32[144,128]{1,0:T(1,128)}', space=vmem, size = 0x12000, scoped, tag = 'internal scratch']
  %s0 = inlined_call_operand.vmem [shape: f32[8,256], index: 0, kind: input, shape index: {}]
  %s1 = inlined_call_operand.vmem [shape: bf16[256,1024], index: 1, kind: input, shape index: {}]
  %s2 = inlined_call_operand.vmem [shape: f32[1,1024], index: 2, kind: input, shape index: {}]
  %s3 = inlined_call_operand.vmem [shape: bf16[1024,384], index: 3, kind: input, shape index: {}]
  %s4 = inlined_call_operand.vmem [shape: f32[1,384], index: 4, kind: input, shape index: {}]
  %s5 = inlined_call_operand.vmem [shape: f32[8,384], index: 5, kind: output, shape index: {}]
  %s6 = sld [smem:[#allocation0]]
  $region49: #{offset_predictor.1} parent=0
    _
  %s8 = ssub.s32 1, %s6
  %s9 = scalar_select 0, %s8, %s6
  $region1: #{offset_predictor.1} parent=0
    #allocation2 [shape = 'u8[24576]{0}', space=vmem, size = 0x6000, scoped, tag = 'output window, operand 0, single buffered']
    // Predicated region
    $region2: #{offset_predictor.1} parent=1 // pred_check
      _
    $region3: #{offset_predictor.1} parent=1 // pred_check_branch
      %11 = sbr.rel (0) target = $region5
    $region4: #{offset_predictor.1} parent=1 // pred_region
      _
    $region5: #{offset_predictor.1} parent=1 // pred_fallthru
      _
    // Predicated region
    $region6: #{offset_predictor.1} parent=1 // pred_check
      _
    $region7: #{offset_predictor.1} parent=1 // pred_check_branch
      %13 = sbr.rel (0) target = $region9
    $region8: #{offset_predictor.1} parent=1 // pred_region
      _
    $region9: #{offset_predictor.1} parent=1 // pred_fallthru
      _
    // Predicated region
    $region10: #{offset_predictor.1} parent=1 // pred_check
      _
    $region11: #{offset_predictor.1} parent=1 // pred_check_branch
      %15 = sbr.rel (0) target = $region13
    $region12: #{offset_predictor.1} parent=1 // pred_region
      _
    $region13: #{offset_predictor.1} parent=1 // pred_fallthru
      _
    // Predicated region
    $region14: #{offset_predictor.1} parent=1 // pred_check
      _
    $region15: #{offset_predictor.1} parent=1 // pred_check_branch
      %17 = sbr.rel (0) target = $region17
    $region16: #{offset_predictor.1} parent=1 // pred_region
      _
    $region17: #{offset_predictor.1} parent=1 // pred_fallthru
      _
    // Predicated region
    $region18: #{offset_predictor.1} parent=1 // pred_check
      _
    $region19: #{offset_predictor.1} parent=1 // pred_check_branch
      %19 = sbr.rel (0) target = $region21
    $region20: #{offset_predictor.1} parent=1 // pred_region
      _
    $region21: #{offset_predictor.1} parent=1 // pred_fallthru
      _
    %v21 = vld [vmem:[%s0] sm:$0xff]
    %v22 = vld [vmem:[%s0 + $0x8] sm:$0xff]
    %v23 = vld [vmem:[%s0 + $0x10] sm:$0xff]
    %v24 = vld [vmem:[%s0 + $0x18] sm:$0xff]
    %v25 = vpack.c.bf16 %v23, %v21
    %v26 = vpack.c.bf16 %v24, %v22
    %v27 = vld [vmem:[%s1] sm:$0xff]
    %v28 = vld [vmem:[%s1 + $0x8] sm:$0xff]
    %v29 = vld [vmem:[%s1 + $0x10] sm:$0xff]
    %v30 = vld [vmem:[%s1 + $0x18] sm:$0xff]
    %v31 = vld [vmem:[%s1 + $0x20] sm:$0xff]
    %v32 = vld [vmem:[%s1 + $0x28] sm:$0xff]
    %v33 = vld [vmem:[%s1 + $0x30] sm:$0xff]
    %v34 = vld [vmem:[%s1 + $0x38] sm:$0xff]
    %v35 = vld [vmem:[%s1 + $0x40] sm:$0xff]
    %v36 = vld [vmem:[%s1 + $0x48] sm:$0xff]
    %v37 = vld [vmem:[%s1 + $0x50] sm:$0xff]
    %v38 = vld [vmem:[%s1 + $0x58] sm:$0xff]
    %v39 = vld [vmem:[%s1 + $0x60] sm:$0xff]
    %v40 = vld [vmem:[%s1 + $0x68] sm:$0xff]
    %v41 = vld [vmem:[%s1 + $0x70] sm:$0xff]
    %v42 = vld [vmem:[%s1 + $0x78] sm:$0xff]
    %v43 = vld [vmem:[%s1 + $0x80] sm:$0xff]
    %v44 = vld [vmem:[%s1 + $0x88] sm:$0xff]
    %v45 = vld [vmem:[%s1 + $0x90] sm:$0xff]
    %v46 = vld [vmem:[%s1 + $0x98] sm:$0xff]
    %v47 = vld [vmem:[%s1 + $0xa0] sm:$0xff]
    %v48 = vld [vmem:[%s1 + $0xa8] sm:$0xff]
    %v49 = vld [vmem:[%s1 + $0xb0] sm:$0xff]
    %v50 = vld [vmem:[%s1 + $0xb8] sm:$0xff]
    %v51 = vld [vmem:[%s1 + $0xc0] sm:$0xff]
    %v52 = vld [vmem:[%s1 + $0xc8] sm:$0xff]
    %v53 = vld [vmem:[%s1 + $0xd0] sm:$0xff]
    %v54 = vld [vmem:[%s1 + $0xd8] sm:$0xff]
    %v55 = vld [vmem:[%s1 + $0xe0] sm:$0xff]
    %v56 = vld [vmem:[%s1 + $0xe8] sm:$0xff]
    %v57 = vld [vmem:[%s1 + $0xf0] sm:$0xff]
    %v58 = vld [vmem:[%s1 + $0xf8] sm:$0xff]
    %v59 = vld [vmem:[%s1 + $0x100] sm:$0xff]
    %v60 = vld [vmem:[%s1 + $0x108] sm:$0xff]
    %v61 = vld [vmem:[%s1 + $0x110] sm:$0xff]
    %v62 = vld [vmem:[%s1 + $0x118] sm:$0xff]
    %v63 = vld [vmem:[%s1 + $0x120] sm:$0xff]
    %v64 = vld [vmem:[%s1 + $0x128] sm:$0xff]
    %v65 = vld [vmem:[%s1 + $0x130] sm:$0xff]
    %v66 = vld [vmem:[%s1 + $0x138] sm:$0xff]
    %v67 = vld [vmem:[%s1 + $0x140] sm:$0xff]
    %v68 = vld [vmem:[%s1 + $0x148] sm:$0xff]
    %v69 = vld [vmem:[%s1 + $0x150] sm:$0xff]
    %v70 = vld [vmem:[%s1 + $0x158] sm:$0xff]
    %v71 = vld [vmem:[%s1 + $0x160] sm:$0xff]
    %v72 = vld [vmem:[%s1 + $0x168] sm:$0xff]
    %v73 = vld [vmem:[%s1 + $0x170] sm:$0xff]
    %v74 = vld [vmem:[%s1 + $0x178] sm:$0xff]
    %v75 = vld [vmem:[%s1 + $0x180] sm:$0xff]
    %v76 = vld [vmem:[%s1 + $0x188] sm:$0xff]
    %v77 = vld [vmem:[%s1 + $0x190] sm:$0xff]
    %v78 = vld [vmem:[%s1 + $0x198] sm:$0xff]
    %v79 = vld [vmem:[%s1 + $0x1a0] sm:$0xff]
    %v80 = vld [vmem:[%s1 + $0x1a8] sm:$0xff]
    %v81 = vld [vmem:[%s1 + $0x1b0] sm:$0xff]
    %v82 = vld [vmem:[%s1 + $0x1b8] sm:$0xff]
    %v83 = vld [vmem:[%s1 + $0x1c0] sm:$0xff]
    %v84 = vld [vmem:[%s1 + $0x1c8] sm:$0xff]
    %v85 = vld [vmem:[%s1 + $0x1d0] sm:$0xff]
    %v86 = vld [vmem:[%s1 + $0x1d8] sm:$0xff]
    %v87 = vld [vmem:[%s1 + $0x1e0] sm:$0xff]
    %v88 = vld [vmem:[%s1 + $0x1e8] sm:$0xff]
    %v89 = vld [vmem:[%s1 + $0x1f0] sm:$0xff]
    %v90 = vld [vmem:[%s1 + $0x1f8] sm:$0xff]
    %v91 = vld [vmem:[%s1 + $0x200] sm:$0xff]
    %v92 = vld [vmem:[%s1 + $0x208] sm:$0xff]
    %v93 = vld [vmem:[%s1 + $0x210] sm:$0xff]
    %v94 = vld [vmem:[%s1 + $0x218] sm:$0xff]
    %v95 = vld [vmem:[%s1 + $0x220] sm:$0xff]
    %v96 = vld [vmem:[%s1 + $0x228] sm:$0xff]
    %v97 = vld [vmem:[%s1 + $0x230] sm:$0xff]
    %v98 = vld [vmem:[%s1 + $0x238] sm:$0xff]
    %v99 = vld [vmem:[%s1 + $0x240] sm:$0xff]
    %v100 = vld [vmem:[%s1 + $0x248] sm:$0xff]
    %v101 = vld [vmem:[%s1 + $0x250] sm:$0xff]
    %v102 = vld [vmem:[%s1 + $0x258] sm:$0xff]
    %v103 = vld [vmem:[%s1 + $0x260] sm:$0xff]
    %v104 = vld [vmem:[%s1 + $0x268] sm:$0xff]
    %v105 = vld [vmem:[%s1 + $0x270] sm:$0xff]
    %v106 = vld [vmem:[%s1 + $0x278] sm:$0xff]
    %v107 = vld [vmem:[%s1 + $0x280] sm:$0xff]
    %v108 = vld [vmem:[%s1 + $0x288] sm:$0xff]
    %v109 = vld [vmem:[%s1 + $0x290] sm:$0xff]
    %v110 = vld [vmem:[%s1 + $0x298] sm:$0xff]
    %v111 = vld [vmem:[%s1 + $0x2a0] sm:$0xff]
    %v112 = vld [vmem:[%s1 + $0x2a8] sm:$0xff]
    %v113 = vld [vmem:[%s1 + $0x2b0] sm:$0xff]
    %v114 = vld [vmem:[%s1 + $0x2b8] sm:$0xff]
    %v115 = vld [vmem:[%s1 + $0x2c0] sm:$0xff]
    %v116 = vld [vmem:[%s1 + $0x2c8] sm:$0xff]
    %v117 = vld [vmem:[%s1 + $0x2d0] sm:$0xff]
    %v118 = vld [vmem:[%s1 + $0x2d8] sm:$0xff]
    %v119 = vld [vmem:[%s1 + $0x2e0] sm:$0xff]
    %v120 = vld [vmem:[%s1 + $0x2e8] sm:$0xff]
    %v121 = vld [vmem:[%s1 + $0x2f0] sm:$0xff]
    %v122 = vld [vmem:[%s1 + $0x2f8] sm:$0xff]
    %v123 = vld [vmem:[%s1 + $0x300] sm:$0xff]
    %v124 = vld [vmem:[%s1 + $0x308] sm:$0xff]
    %v125 = vld [vmem:[%s1 + $0x310] sm:$0xff]
    %v126 = vld [vmem:[%s1 + $0x318] sm:$0xff]
    %v127 = vld [vmem:[%s1 + $0x320] sm:$0xff]
    %v128 = vld [vmem:[%s1 + $0x328] sm:$0xff]
    %v129 = vld [vmem:[%s1 + $0x330] sm:$0xff]
    %v130 = vld [vmem:[%s1 + $0x338] sm:$0xff]
    %v131 = vld [vmem:[%s1 + $0x340] sm:$0xff]
    %v132 = vld [vmem:[%s1 + $0x348] sm:$0xff]
    %v133 = vld [vmem:[%s1 + $0x350] sm:$0xff]
    %v134 = vld [vmem:[%s1 + $0x358] sm:$0xff]
    %v135 = vld [vmem:[%s1 + $0x360] sm:$0xff]
    %v136 = vld [vmem:[%s1 + $0x368] sm:$0xff]
    %v137 = vld [vmem:[%s1 + $0x370] sm:$0xff]
    %v138 = vld [vmem:[%s1 + $0x378] sm:$0xff]
    %v139 = vld [vmem:[%s1 + $0x380] sm:$0xff]
    %v140 = vld [vmem:[%s1 + $0x388] sm:$0xff]
    %v141 = vld [vmem:[%s1 + $0x390] sm:$0xff]
    %v142 = vld [vmem:[%s1 + $0x398] sm:$0xff]
    %v143 = vld [vmem:[%s1 + $0x3a0] sm:$0xff]
    %v144 = vld [vmem:[%s1 + $0x3a8] sm:$0xff]
    %v145 = vld [vmem:[%s1 + $0x3b0] sm:$0xff]
    %v146 = vld [vmem:[%s1 + $0x3b8] sm:$0xff]
    %v147 = vld [vmem:[%s1 + $0x3c0] sm:$0xff]
    %v148 = vld [vmem:[%s1 + $0x3c8] sm:$0xff]
    %v149 = vld [vmem:[%s1 + $0x3d0] sm:$0xff]
    %v150 = vld [vmem:[%s1 + $0x3d8] sm:$0xff]
    %v151 = vld [vmem:[%s1 + $0x3e0] sm:$0xff]
    %v152 = vld [vmem:[%s1 + $0x3e8] sm:$0xff]
    %v153 = vld [vmem:[%s1 + $0x3f0] sm:$0xff]
    %v154 = vld [vmem:[%s1 + $0x3f8] sm:$0xff]
    %v155 = vld [vmem:[%s2] sm:$0xff]
    %v157 = vlaneseq
    %v158 = vshrl.u32 %v157, 7
    %v159 = vsub.s32 0, %v158
    %v160 = vrot.slane %v155, %v159
    %v161 = vlaneseq
    %v162 = vshrl.u32 %v161, 7
    %v163 = vsub.s32 1, %v162
    %v164 = vrot.slane %v155, %v163
    %v165 = vlaneseq
    %v166 = vshrl.u32 %v165, 7
    %v167 = vsub.s32 2, %v166
    %v168 = vrot.slane %v155, %v167
    %v169 = vlaneseq
    %v170 = vshrl.u32 %v169, 7
    %v171 = vsub.s32 3, %v170
    %v172 = vrot.slane %v155, %v171
    %v173 = vlaneseq
    %v174 = vshrl.u32 %v173, 7
    %v175 = vsub.s32 4, %v174
    %v176 = vrot.slane %v155, %v175
    %v177 = vlaneseq
    %v178 = vshrl.u32 %v177, 7
    %v179 = vsub.s32 5, %v178
    %v180 = vrot.slane %v155, %v179
    %v181 = vlaneseq
    %v182 = vshrl.u32 %v181, 7
    %v183 = vsub.s32 6, %v182
    %v184 = vrot.slane %v155, %v183
    %v185 = vlaneseq
    %v186 = vshrl.u32 %v185, 7
    %v187 = vsub.s32 7, %v186
    %v188 = vrot.slane %v155, %v187
    %v325 = vunpack.c.l.b16 %v27
    %v326 = vunpack.c.h.b16 %v27
    %v327 = vunpack.c.l.b16 %v28
    %v328 = vunpack.c.h.b16 %v28
    %v329 = vunpack.c.l.b16 %v29
    %v330 = vunpack.c.h.b16 %v29
    %v331 = vunpack.c.l.b16 %v30
    %v332 = vunpack.c.h.b16 %v30
    %v333 = vunpack.c.l.b16 %v31
    %v334 = vunpack.c.h.b16 %v31
    %v335 = vunpack.c.l.b16 %v32
    %v336 = vunpack.c.h.b16 %v32
    %v337 = vunpack.c.l.b16 %v33
    %v338 = vunpack.c.h.b16 %v33
    %v339 = vunpack.c.l.b16 %v34
    %v340 = vunpack.c.h.b16 %v34
    %v341 = vunpack.c.l.b16 %v35
    %v342 = vunpack.c.h.b16 %v35
    %v343 = vunpack.c.l.b16 %v36
    %v344 = vunpack.c.h.b16 %v36
    %v345 = vunpack.c.l.b16 %v37
    %v346 = vunpack.c.h.b16 %v37
    %v347 = vunpack.c.l.b16 %v38
    %v348 = vunpack.c.h.b16 %v38
    %v349 = vunpack.c.l.b16 %v39
    %v350 = vunpack.c.h.b16 %v39
    %v351 = vunpack.c.l.b16 %v40
    %v352 = vunpack.c.h.b16 %v40
    %v353 = vunpack.c.l.b16 %v41
    %v354 = vunpack.c.h.b16 %v41
    %v355 = vunpack.c.l.b16 %v42
    %v356 = vunpack.c.h.b16 %v42
    %v357 = vunpack.c.l.b16 %v43
    %v358 = vunpack.c.h.b16 %v43
    %v359 = vunpack.c.l.b16 %v44
    %v360 = vunpack.c.h.b16 %v44
    %v361 = vunpack.c.l.b16 %v45
    %v362 = vunpack.c.h.b16 %v45
    %v363 = vunpack.c.l.b16 %v46
    %v364 = vunpack.c.h.b16 %v46
    %v365 = vunpack.c.l.b16 %v47
    %v366 = vunpack.c.h.b16 %v47
    %v367 = vunpack.c.l.b16 %v48
    %v368 = vunpack.c.h.b16 %v48
    %v369 = vunpack.c.l.b16 %v49
    %v370 = vunpack.c.h.b16 %v49
    %v371 = vunpack.c.l.b16 %v50
    %v372 = vunpack.c.h.b16 %v50
    %v373 = vunpack.c.l.b16 %v51
    %v374 = vunpack.c.h.b16 %v51
    %v375 = vunpack.c.l.b16 %v52
    %v376 = vunpack.c.h.b16 %v52
    %v377 = vunpack.c.l.b16 %v53
    %v378 = vunpack.c.h.b16 %v53
    %v379 = vunpack.c.l.b16 %v54
    %v380 = vunpack.c.h.b16 %v54
    %v381 = vunpack.c.l.b16 %v55
    %v382 = vunpack.c.h.b16 %v55
    %v383 = vunpack.c.l.b16 %v56
    %v384 = vunpack.c.h.b16 %v56
    %v385 = vunpack.c.l.b16 %v57
    %v386 = vunpack.c.h.b16 %v57
    %v387 = vunpack.c.l.b16 %v58
    %v388 = vunpack.c.h.b16 %v58
    %v389 = vunpack.c.l.b16 %v59
    %v390 = vunpack.c.h.b16 %v59
    %v391 = vunpack.c.l.b16 %v60
    %v392 = vunpack.c.h.b16 %v60
    %v393 = vunpack.c.l.b16 %v61
    %v394 = vunpack.c.h.b16 %v61
    %v395 = vunpack.c.l.b16 %v62
    %v396 = vunpack.c.h.b16 %v62
    %v397 = vunpack.c.l.b16 %v63
    %v398 = vunpack.c.h.b16 %v63
    %v399 = vunpack.c.l.b16 %v64
    %v400 = vunpack.c.h.b16 %v64
    %v401 = vunpack.c.l.b16 %v65
    %v402 = vunpack.c.h.b16 %v65
    %v403 = vunpack.c.l.b16 %v66
    %v404 = vunpack.c.h.b16 %v66
    %v405 = vunpack.c.l.b16 %v67
    %v406 = vunpack.c.h.b16 %v67
    %v407 = vunpack.c.l.b16 %v68
    %v408 = vunpack.c.h.b16 %v68
    %v409 = vunpack.c.l.b16 %v69
    %v410 = vunpack.c.h.b16 %v69
    %v411 = vunpack.c.l.b16 %v70
    %v412 = vunpack.c.h.b16 %v70
    %v413 = vunpack.c.l.b16 %v71
    %v414 = vunpack.c.h.b16 %v71
    %v415 = vunpack.c.l.b16 %v72
    %v416 = vunpack.c.h.b16 %v72
    %v417 = vunpack.c.l.b16 %v73
    %v418 = vunpack.c.h.b16 %v73
    %v419 = vunpack.c.l.b16 %v74
    %v420 = vunpack.c.h.b16 %v74
    %v421 = vunpack.c.l.b16 %v75
    %v422 = vunpack.c.h.b16 %v75
    %v423 = vunpack.c.l.b16 %v76
    %v424 = vunpack.c.h.b16 %v76
    %v425 = vunpack.c.l.b16 %v77
    %v426 = vunpack.c.h.b16 %v77
    %v427 = vunpack.c.l.b16 %v78
    %v428 = vunpack.c.h.b16 %v78
    %v429 = vunpack.c.l.b16 %v79
    %v430 = vunpack.c.h.b16 %v79
    %v431 = vunpack.c.l.b16 %v80
    %v432 = vunpack.c.h.b16 %v80
    %v433 = vunpack.c.l.b16 %v81
    %v434 = vunpack.c.h.b16 %v81
    %v435 = vunpack.c.l.b16 %v82
    %v436 = vunpack.c.h.b16 %v82
    %v437 = vunpack.c.l.b16 %v83
    %v438 = vunpack.c.h.b16 %v83
    %v439 = vunpack.c.l.b16 %v84
    %v440 = vunpack.c.h.b16 %v84
    %v441 = vunpack.c.l.b16 %v85
    %v442 = vunpack.c.h.b16 %v85
    %v443 = vunpack.c.l.b16 %v86
    %v444 = vunpack.c.h.b16 %v86
    %v445 = vunpack.c.l.b16 %v87
    %v446 = vunpack.c.h.b16 %v87
    %v447 = vunpack.c.l.b16 %v88
    %v448 = vunpack.c.h.b16 %v88
    %v449 = vunpack.c.l.b16 %v89
    %v450 = vunpack.c.h.b16 %v89
    %v451 = vunpack.c.l.b16 %v90
    %v452 = vunpack.c.h.b16 %v90
    %v453 = vunpack.c.l.b16 %v91
    %v454 = vunpack.c.h.b16 %v91
    %v455 = vunpack.c.l.b16 %v92
    %v456 = vunpack.c.h.b16 %v92
    %v457 = vunpack.c.l.b16 %v93
    %v458 = vunpack.c.h.b16 %v93
    %v459 = vunpack.c.l.b16 %v94
    %v460 = vunpack.c.h.b16 %v94
    %v461 = vunpack.c.l.b16 %v95
    %v462 = vunpack.c.h.b16 %v95
    %v463 = vunpack.c.l.b16 %v96
    %v464 = vunpack.c.h.b16 %v96
    %v465 = vunpack.c.l.b16 %v97
    %v466 = vunpack.c.h.b16 %v97
    %v467 = vunpack.c.l.b16 %v98
    %v468 = vunpack.c.h.b16 %v98
    %v469 = vunpack.c.l.b16 %v99
    %v470 = vunpack.c.h.b16 %v99
    %v471 = vunpack.c.l.b16 %v100
    %v472 = vunpack.c.h.b16 %v100
    %v473 = vunpack.c.l.b16 %v101
    %v474 = vunpack.c.h.b16 %v101
    %v475 = vunpack.c.l.b16 %v102
    %v476 = vunpack.c.h.b16 %v102
    %v477 = vunpack.c.l.b16 %v103
    %v478 = vunpack.c.h.b16 %v103
    %v479 = vunpack.c.l.b16 %v104
    %v480 = vunpack.c.h.b16 %v104
    %v481 = vunpack.c.l.b16 %v105
    %v482 = vunpack.c.h.b16 %v105
    %v483 = vunpack.c.l.b16 %v106
    %v484 = vunpack.c.h.b16 %v106
    %v485 = vunpack.c.l.b16 %v107
    %v486 = vunpack.c.h.b16 %v107
    %v487 = vunpack.c.l.b16 %v108
    %v488 = vunpack.c.h.b16 %v108
    %v489 = vunpack.c.l.b16 %v109
    %v490 = vunpack.c.h.b16 %v109
    %v491 = vunpack.c.l.b16 %v110
    %v492 = vunpack.c.h.b16 %v110
    %v493 = vunpack.c.l.b16 %v111
    %v494 = vunpack.c.h.b16 %v111
    %v495 = vunpack.c.l.b16 %v112
    %v496 = vunpack.c.h.b16 %v112
    %v497 = vunpack.c.l.b16 %v113
    %v498 = vunpack.c.h.b16 %v113
    %v499 = vunpack.c.l.b16 %v114
    %v500 = vunpack.c.h.b16 %v114
    %v501 = vunpack.c.l.b16 %v115
    %v502 = vunpack.c.h.b16 %v115
    %v503 = vunpack.c.l.b16 %v116
    %v504 = vunpack.c.h.b16 %v116
    %v505 = vunpack.c.l.b16 %v117
    %v506 = vunpack.c.h.b16 %v117
    %v507 = vunpack.c.l.b16 %v118
    %v508 = vunpack.c.h.b16 %v118
    %v509 = vunpack.c.l.b16 %v119
    %v510 = vunpack.c.h.b16 %v119
    %v511 = vunpack.c.l.b16 %v120
    %v512 = vunpack.c.h.b16 %v120
    %v513 = vunpack.c.l.b16 %v121
    %v514 = vunpack.c.h.b16 %v121
    %v515 = vunpack.c.l.b16 %v122
    %v516 = vunpack.c.h.b16 %v122
    %v517 = vunpack.c.l.b16 %v123
    %v518 = vunpack.c.h.b16 %v123
    %v519 = vunpack.c.l.b16 %v124
    %v520 = vunpack.c.h.b16 %v124
    %v521 = vunpack.c.l.b16 %v125
    %v522 = vunpack.c.h.b16 %v125
    %v523 = vunpack.c.l.b16 %v126
    %v524 = vunpack.c.h.b16 %v126
    %v525 = vunpack.c.l.b16 %v127
    %v526 = vunpack.c.h.b16 %v127
    %v527 = vunpack.c.l.b16 %v128
    %v528 = vunpack.c.h.b16 %v128
    %v529 = vunpack.c.l.b16 %v129
    %v530 = vunpack.c.h.b16 %v129
    %v531 = vunpack.c.l.b16 %v130
    %v532 = vunpack.c.h.b16 %v130
    %v533 = vunpack.c.l.b16 %v131
    %v534 = vunpack.c.h.b16 %v131
    %v535 = vunpack.c.l.b16 %v132
    %v536 = vunpack.c.h.b16 %v132
    %v537 = vunpack.c.l.b16 %v133
    %v538 = vunpack.c.h.b16 %v133
    %v539 = vunpack.c.l.b16 %v134
    %v540 = vunpack.c.h.b16 %v134
    %v541 = vunpack.c.l.b16 %v135
    %v542 = vunpack.c.h.b16 %v135
    %v543 = vunpack.c.l.b16 %v136
    %v544 = vunpack.c.h.b16 %v136
    %v545 = vunpack.c.l.b16 %v137
    %v546 = vunpack.c.h.b16 %v137
    %v547 = vunpack.c.l.b16 %v138
    %v548 = vunpack.c.h.b16 %v138
    %v549 = vunpack.c.l.b16 %v139
    %v550 = vunpack.c.h.b16 %v139
    %v551 = vunpack.c.l.b16 %v140
    %v552 = vunpack.c.h.b16 %v140
    %v553 = vunpack.c.l.b16 %v141
    %v554 = vunpack.c.h.b16 %v141
    %v555 = vunpack.c.l.b16 %v142
    %v556 = vunpack.c.h.b16 %v142
    %v557 = vunpack.c.l.b16 %v143
    %v558 = vunpack.c.h.b16 %v143
    %v559 = vunpack.c.l.b16 %v144
    %v560 = vunpack.c.h.b16 %v144
    %v561 = vunpack.c.l.b16 %v145
    %v562 = vunpack.c.h.b16 %v145
    %v563 = vunpack.c.l.b16 %v146
    %v564 = vunpack.c.h.b16 %v146
    %v565 = vunpack.c.l.b16 %v147
    %v566 = vunpack.c.h.b16 %v147
    %v567 = vunpack.c.l.b16 %v148
    %v568 = vunpack.c.h.b16 %v148
    %v569 = vunpack.c.l.b16 %v149
    %v570 = vunpack.c.h.b16 %v149
    %v571 = vunpack.c.l.b16 %v150
    %v572 = vunpack.c.h.b16 %v150
    %v573 = vunpack.c.l.b16 %v151
    %v574 = vunpack.c.h.b16 %v151
    %v575 = vunpack.c.l.b16 %v152
    %v576 = vunpack.c.h.b16 %v152
    %v577 = vunpack.c.l.b16 %v153
    %v578 = vunpack.c.h.b16 %v153
    %v579 = vunpack.c.l.b16 %v154
    %v580 = vunpack.c.h.b16 %v154
    %v581 = vpack.c.b16 %v333, %v325
    %v582 = vpack.c.b16 %v334, %v326
    %v583 = vpack.c.b16 %v335, %v327
    %v584 = vpack.c.b16 %v336, %v328
    %v585 = vpack.c.b16 %v337, %v329
    %v586 = vpack.c.b16 %v338, %v330
    %v587 = vpack.c.b16 %v339, %v331
    %v588 = vpack.c.b16 %v340, %v332
    %v589 = vpack.c.b16 %v349, %v341
    %v590 = vpack.c.b16 %v350, %v342
    %v591 = vpack.c.b16 %v351, %v343
    %v592 = vpack.c.b16 %v352, %v344
    %v593 = vpack.c.b16 %v353, %v345
    %v594 = vpack.c.b16 %v354, %v346
    %v595 = vpack.c.b16 %v355, %v347
    %v596 = vpack.c.b16 %v356, %v348
    %v597 = vpack.c.b16 %v365, %v357
    %v598 = vpack.c.b16 %v366, %v358
    %v599 = vpack.c.b16 %v367, %v359
    %v600 = vpack.c.b16 %v368, %v360
    %v601 = vpack.c.b16 %v369, %v361
    %v602 = vpack.c.b16 %v370, %v362
    %v603 = vpack.c.b16 %v371, %v363
    %v604 = vpack.c.b16 %v372, %v364
    %v605 = vpack.c.b16 %v381, %v373
    %v606 = vpack.c.b16 %v382, %v374
    %v607 = vpack.c.b16 %v383, %v375
    %v608 = vpack.c.b16 %v384, %v376
    %v609 = vpack.c.b16 %v385, %v377
    %v610 = vpack.c.b16 %v386, %v378
    %v611 = vpack.c.b16 %v387, %v379
    %v612 = vpack.c.b16 %v388, %v380
    %v613 = vpack.c.b16 %v397, %v389
    %v614 = vpack.c.b16 %v398, %v390
    %v615 = vpack.c.b16 %v399, %v391
    %v616 = vpack.c.b16 %v400, %v392
    %v617 = vpack.c.b16 %v401, %v393
    %v618 = vpack.c.b16 %v402, %v394
    %v619 = vpack.c.b16 %v403, %v395
    %v620 = vpack.c.b16 %v404, %v396
    %v621 = vpack.c.b16 %v413, %v405
    %v622 = vpack.c.b16 %v414, %v406
    %v623 = vpack.c.b16 %v415, %v407
    %v624 = vpack.c.b16 %v416, %v408
    %v625 = vpack.c.b16 %v417, %v409
    %v626 = vpack.c.b16 %v418, %v410
    %v627 = vpack.c.b16 %v419, %v411
    %v628 = vpack.c.b16 %v420, %v412
    %v629 = vpack.c.b16 %v429, %v421
    %v630 = vpack.c.b16 %v430, %v422
    %v631 = vpack.c.b16 %v431, %v423
    %v632 = vpack.c.b16 %v432, %v424
    %v633 = vpack.c.b16 %v433, %v425
    %v634 = vpack.c.b16 %v434, %v426
    %v635 = vpack.c.b16 %v435, %v427
    %v636 = vpack.c.b16 %v436, %v428
    %v637 = vpack.c.b16 %v445, %v437
    %v638 = vpack.c.b16 %v446, %v438
    %v639 = vpack.c.b16 %v447, %v439
    %v640 = vpack.c.b16 %v448, %v440
    %v641 = vpack.c.b16 %v449, %v441
    %v642 = vpack.c.b16 %v450, %v442
    %v643 = vpack.c.b16 %v451, %v443
    %v644 = vpack.c.b16 %v452, %v444
    %v645 = vpack.c.b16 %v461, %v453
    %v646 = vpack.c.b16 %v462, %v454
    %v647 = vpack.c.b16 %v463, %v455
    %v648 = vpack.c.b16 %v464, %v456
    %v649 = vpack.c.b16 %v465, %v457
    %v650 = vpack.c.b16 %v466, %v458
    %v651 = vpack.c.b16 %v467, %v459
    %v652 = vpack.c.b16 %v468, %v460
    %v653 = vpack.c.b16 %v477, %v469
    %v654 = vpack.c.b16 %v478, %v470
    %v655 = vpack.c.b16 %v479, %v471
    %v656 = vpack.c.b16 %v480, %v472
    %v657 = vpack.c.b16 %v481, %v473
    %v658 = vpack.c.b16 %v482, %v474
    %v659 = vpack.c.b16 %v483, %v475
    %v660 = vpack.c.b16 %v484, %v476
    %v661 = vpack.c.b16 %v493, %v485
    %v662 = vpack.c.b16 %v494, %v486
    %v663 = vpack.c.b16 %v495, %v487
    %v664 = vpack.c.b16 %v496, %v488
    %v665 = vpack.c.b16 %v497, %v489
    %v666 = vpack.c.b16 %v498, %v490
    %v667 = vpack.c.b16 %v499, %v491
    %v668 = vpack.c.b16 %v500, %v492
    %v669 = vpack.c.b16 %v509, %v501
    %v670 = vpack.c.b16 %v510, %v502
    %v671 = vpack.c.b16 %v511, %v503
    %v672 = vpack.c.b16 %v512, %v504
    %v673 = vpack.c.b16 %v513, %v505
    %v674 = vpack.c.b16 %v514, %v506
    %v675 = vpack.c.b16 %v515, %v507
    %v676 = vpack.c.b16 %v516, %v508
    %v677 = vpack.c.b16 %v525, %v517
    %v678 = vpack.c.b16 %v526, %v518
    %v679 = vpack.c.b16 %v527, %v519
    %v680 = vpack.c.b16 %v528, %v520
    %v681 = vpack.c.b16 %v529, %v521
    %v682 = vpack.c.b16 %v530, %v522
    %v683 = vpack.c.b16 %v531, %v523
    %v684 = vpack.c.b16 %v532, %v524
    %v685 = vpack.c.b16 %v541, %v533
    %v686 = vpack.c.b16 %v542, %v534
    %v687 = vpack.c.b16 %v543, %v535
    %v688 = vpack.c.b16 %v544, %v536
    %v689 = vpack.c.b16 %v545, %v537
    %v690 = vpack.c.b16 %v546, %v538
    %v691 = vpack.c.b16 %v547, %v539
    %v692 = vpack.c.b16 %v548, %v540
    %v693 = vpack.c.b16 %v557, %v549
    %v694 = vpack.c.b16 %v558, %v550
    %v695 = vpack.c.b16 %v559, %v551
    %v696 = vpack.c.b16 %v560, %v552
    %v697 = vpack.c.b16 %v561, %v553
    %v698 = vpack.c.b16 %v562, %v554
    %v699 = vpack.c.b16 %v563, %v555
    %v700 = vpack.c.b16 %v564, %v556
    %v701 = vpack.c.b16 %v573, %v565
    %v702 = vpack.c.b16 %v574, %v566
    %v703 = vpack.c.b16 %v575, %v567
    %v704 = vpack.c.b16 %v576, %v568
    %v705 = vpack.c.b16 %v577, %v569
    %v706 = vpack.c.b16 %v578, %v570
    %v707 = vpack.c.b16 %v579, %v571
    %v708 = vpack.c.b16 %v580, %v572
    %837 = vmatprep.subr.bf16.mxu0 %v638
    %838 = vmatpush1.bf16.msra.mxu0 %v637
    %839 = vmatprep.subr.bf16.mxu0 %v630
    %840 = vmatpush1.bf16.msra.mxu0 %v629
    %841 = vmatprep.subr.bf16.mxu0 %v622
    %842 = vmatpush1.bf16.msra.mxu0 %v621
    %843 = vmatprep.subr.bf16.mxu0 %v614
    %844 = vmatpush1.bf16.msra.mxu0 %v613
    %845 = vmatprep.subr.bf16.mxu0 %v606
    %846 = vmatpush1.bf16.msra.mxu0 %v605
    %847 = vmatprep.subr.bf16.mxu0 %v598
    %848 = vmatpush1.bf16.msra.mxu0 %v597
    %849 = vmatprep.subr.bf16.mxu0 %v590
    %850 = vmatpush1.bf16.msra.mxu0 %v589
    %851 = vmatprep.subr.bf16.mxu0 %v582
    %852 = vmatpush1.bf16.msra.mxu0 %v581
    %853 = vmatprep.subr.bf16.mxu0 %v702
    %854 = vmatpush2.bf16.msra.mxu0 %v701
    %855 = vmatprep.subr.bf16.mxu0 %v694
    %856 = vmatpush2.bf16.msra.mxu0 %v693
    %857 = vmatprep.subr.bf16.mxu0 %v686
    %858 = vmatpush2.bf16.msra.mxu0 %v685
    %859 = vmatprep.subr.bf16.mxu0 %v678
    %860 = vmatpush2.bf16.msra.mxu0 %v677
    %861 = vmatprep.subr.bf16.mxu0 %v670
    %862 = vmatpush2.bf16.msra.mxu0 %v669
    %863 = vmatprep.subr.bf16.mxu0 %v662
    %864 = vmatpush2.bf16.msra.mxu0 %v661
    %865 = vmatprep.subr.bf16.mxu0 %v654
    %866 = vmatpush2.bf16.msra.mxu0 %v653
    %867 = vmatprep.subr.bf16.mxu0 %v646
    %868 = vmatpush2.bf16.msra.mxu0 %v645
    %869 = vmatprep.mubr.bf16.mxu0 %v26
    %870 = vmatmul.mubr.bf16.gmra.mxu0 %v25
    %v871 = vpop.f32.mrf.mxu0
    %v872 = vadd.f32 %v160, %v871
    %v873 = vpop.f32.mrf.mxu0
    %v874 = vadd.f32 %v164, %v873
    %v875 = vpop.f32.mrf.mxu0
    %v876 = vadd.f32 %v160, %v875
    %v877 = vpop.f32.mrf.mxu0
    %v878 = vadd.f32 %v164, %v877
    %879 = vdwg.mxu0
    %880 = vmatprep.subr.bf16.mxu0 %v640
    %881 = vmatpush1.bf16.msra.mxu0 %v639
    %882 = vmatprep.subr.bf16.mxu0 %v632
    %883 = vmatpush1.bf16.msra.mxu0 %v631
    %884 = vmatprep.subr.bf16.mxu0 %v624
    %885 = vmatpush1.bf16.msra.mxu0 %v623
    %886 = vmatprep.subr.bf16.mxu0 %v616
    %887 = vmatpush1.bf16.msra.mxu0 %v615
    %888 = vmatprep.subr.bf16.mxu0 %v608
    %889 = vmatpush1.bf16.msra.mxu0 %v607
    %890 = vmatprep.subr.bf16.mxu0 %v600
    %891 = vmatpush1.bf16.msra.mxu0 %v599
    %892 = vmatprep.subr.bf16.mxu0 %v592
    %893 = vmatpush1.bf16.msra.mxu0 %v591
    %894 = vmatprep.subr.bf16.mxu0 %v584
    %895 = vmatpush1.bf16.msra.mxu0 %v583
    %896 = vmatprep.subr.bf16.mxu0 %v704
    %897 = vmatpush2.bf16.msra.mxu0 %v703
    %898 = vmatprep.subr.bf16.mxu0 %v696
    %899 = vmatpush2.bf16.msra.mxu0 %v695
    %900 = vmatprep.subr.bf16.mxu0 %v688
    %901 = vmatpush2.bf16.msra.mxu0 %v687
    %902 = vmatprep.subr.bf16.mxu0 %v680
    %903 = vmatpush2.bf16.msra.mxu0 %v679
    %904 = vmatprep.subr.bf16.mxu0 %v672
    %905 = vmatpush2.bf16.msra.mxu0 %v671
    %906 = vmatprep.subr.bf16.mxu0 %v664
    %907 = vmatpush2.bf16.msra.mxu0 %v663
    %908 = vmatprep.subr.bf16.mxu0 %v656
    %909 = vmatpush2.bf16.msra.mxu0 %v655
    %910 = vmatprep.subr.bf16.mxu0 %v648
    %911 = vmatpush2.bf16.msra.mxu0 %v647
    %912 = vmatprep.mubr.bf16.mxu0 %v26
    %913 = vmatmul.mubr.bf16.gmra.mxu0 %v25
    %v914 = vpop.f32.mrf.mxu0
    %v915 = vadd.f32 %v168, %v914
    %v916 = vpop.f32.mrf.mxu0
    %v917 = vadd.f32 %v172, %v916
    %v918 = vpop.f32.mrf.mxu0
    %v919 = vadd.f32 %v168, %v918
    %v920 = vpop.f32.mrf.mxu0
    %v921 = vadd.f32 %v172, %v920
    %922 = vdwg.mxu0
    %923 = vmatprep.subr.bf16.mxu0 %v642
    %924 = vmatpush1.bf16.msra.mxu0 %v641
    %925 = vmatprep.subr.bf16.mxu0 %v634
    %926 = vmatpush1.bf16.msra.mxu0 %v633
    %927 = vmatprep.subr.bf16.mxu0 %v626
    %928 = vmatpush1.bf16.msra.mxu0 %v625
    %929 = vmatprep.subr.bf16.mxu0 %v618
    %930 = vmatpush1.bf16.msra.mxu0 %v617
    %931 = vmatprep.subr.bf16.mxu0 %v610
    %932 = vmatpush1.bf16.msra.mxu0 %v609
    %933 = vmatprep.subr.bf16.mxu0 %v602
    %934 = vmatpush1.bf16.msra.mxu0 %v601
    %935 = vmatprep.subr.bf16.mxu0 %v594
    %936 = vmatpush1.bf16.msra.mxu0 %v593
    %937 = vmatprep.subr.bf16.mxu0 %v586
    %938 = vmatpush1.bf16.msra.mxu0 %v585
    %939 = vmatprep.subr.bf16.mxu0 %v706
    %940 = vmatpush2.bf16.msra.mxu0 %v705
    %941 = vmatprep.subr.bf16.mxu0 %v698
    %942 = vmatpush2.bf16.msra.mxu0 %v697
    %943 = vmatprep.subr.bf16.mxu0 %v690
    %944 = vmatpush2.bf16.msra.mxu0 %v689
    %945 = vmatprep.subr.bf16.mxu0 %v682
    %946 = vmatpush2.bf16.msra.mxu0 %v681
    %947 = vmatprep.subr.bf16.mxu0 %v674
    %948 = vmatpush2.bf16.msra.mxu0 %v673
    %949 = vmatprep.subr.bf16.mxu0 %v666
    %950 = vmatpush2.bf16.msra.mxu0 %v665
    %951 = vmatprep.subr.bf16.mxu0 %v658
    %952 = vmatpush2.bf16.msra.mxu0 %v657
    %953 = vmatprep.subr.bf16.mxu0 %v650
    %954 = vmatpush2.bf16.msra.mxu0 %v649
    %955 = vmatprep.mubr.bf16.mxu0 %v26
    %956 = vmatmul.mubr.bf16.gmra.mxu0 %v25
    %v957 = vpop.f32.mrf.mxu0
    %v958 = vadd.f32 %v176, %v957
    %v959 = vpop.f32.mrf.mxu0
    %v960 = vadd.f32 %v180, %v959
    %v961 = vpop.f32.mrf.mxu0
    %v962 = vadd.f32 %v176, %v961
    %v963 = vpop.f32.mrf.mxu0
    %v964 = vadd.f32 %v180, %v963
    %965 = vdwg.mxu0
    %966 = vmatprep.subr.bf16.mxu0 %v644
    %967 = vmatpush1.bf16.msra.mxu0 %v643
    %968 = vmatprep.subr.bf16.mxu0 %v636
    %969 = vmatpush1.bf16.msra.mxu0 %v635
    %970 = vmatprep.subr.bf16.mxu0 %v628
    %971 = vmatpush1.bf16.msra.mxu0 %v627
    %972 = vmatprep.subr.bf16.mxu0 %v620
    %973 = vmatpush1.bf16.msra.mxu0 %v619
    %974 = vmatprep.subr.bf16.mxu0 %v612
    %975 = vmatpush1.bf16.msra.mxu0 %v611
    %976 = vmatprep.subr.bf16.mxu0 %v604
    %977 = vmatpush1.bf16.msra.mxu0 %v603
    %978 = vmatprep.subr.bf16.mxu0 %v596
    %979 = vmatpush1.bf16.msra.mxu0 %v595
    %980 = vmatprep.subr.bf16.mxu0 %v588
    %981 = vmatpush1.bf16.msra.mxu0 %v587
    %982 = vmatprep.subr.bf16.mxu0 %v708
    %983 = vmatpush2.bf16.msra.mxu0 %v707
    %984 = vmatprep.subr.bf16.mxu0 %v700
    %985 = vmatpush2.bf16.msra.mxu0 %v699
    %986 = vmatprep.subr.bf16.mxu0 %v692
    %987 = vmatpush2.bf16.msra.mxu0 %v691
    %988 = vmatprep.subr.bf16.mxu0 %v684
    %989 = vmatpush2.bf16.msra.mxu0 %v683
    %990 = vmatprep.subr.bf16.mxu0 %v676
    %991 = vmatpush2.bf16.msra.mxu0 %v675
    %992 = vmatprep.subr.bf16.mxu0 %v668
    %993 = vmatpush2.bf16.msra.mxu0 %v667
    %994 = vmatprep.subr.bf16.mxu0 %v660
    %995 = vmatpush2.bf16.msra.mxu0 %v659
    %996 = vmatprep.subr.bf16.mxu0 %v652
    %997 = vmatpush2.bf16.msra.mxu0 %v651
    %998 = vmatprep.mubr.bf16.mxu0 %v26
    %999 = vmatmul.mubr.bf16.gmra.mxu0 %v25
    %v1000 = vpop.f32.mrf.mxu0
    %v1001 = vadd.f32 %v184, %v1000
    %v1002 = vpop.f32.mrf.mxu0
    %v1003 = vadd.f32 %v188, %v1002
    %v1004 = vpop.f32.mrf.mxu0
    %v1005 = vadd.f32 %v184, %v1004
    %v1006 = vpop.f32.mrf.mxu0
    %v1007 = vadd.f32 %v188, %v1006
    %1008 = vdwg.mxu0
    %v1009 = vmax.f32 %v872, 0.0
    %v1010 = vmax.f32 %v874, 0.0
    %v1011 = vmax.f32 %v915, 0.0
    %v1012 = vmax.f32 %v917, 0.0
    %v1013 = vmax.f32 %v958, 0.0
    %v1014 = vmax.f32 %v960, 0.0
    %v1015 = vmax.f32 %v1001, 0.0
    %v1016 = vmax.f32 %v1003, 0.0
    %v1017 = vmax.f32 %v876, 0.0
    %v1018 = vmax.f32 %v878, 0.0
    %v1019 = vmax.f32 %v919, 0.0
    %v1020 = vmax.f32 %v921, 0.0
    %v1021 = vmax.f32 %v962, 0.0
    %v1022 = vmax.f32 %v964, 0.0
    %v1023 = vmax.f32 %v1005, 0.0
    %v1024 = vmax.f32 %v1007, 0.0
    %v1025 = vpack.c.bf16 %v1017, %v1009
    %v1026 = vpack.c.bf16 %v1018, %v1010
    %v1027 = vpack.c.bf16 %v1019, %v1011
    %v1028 = vpack.c.bf16 %v1020, %v1012
    %v1029 = vpack.c.bf16 %v1021, %v1013
    %v1030 = vpack.c.bf16 %v1022, %v1014
    %v1031 = vpack.c.bf16 %v1023, %v1015
    %v1032 = vpack.c.bf16 %v1024, %v1016
    %v1033 = vld [vmem:[%s3] sm:$0xff]
    %v1034 = vld [vmem:[%s3 + $0x8] sm:$0xf]
    %v1035 = vld [vmem:[%s3 + $0xc] sm:$0xff]
    %v1036 = vld [vmem:[%s3 + $0x14] sm:$0xf]
    %v1037 = vld [vmem:[%s3 + $0x18] sm:$0xff]
    %v1038 = vld [vmem:[%s3 + $0x20] sm:$0xf]
    %v1039 = vld [vmem:[%s3 + $0x24] sm:$0xff]
    %v1040 = vld [vmem:[%s3 + $0x2c] sm:$0xf]
    %v1041 = vld [vmem:[%s3 + $0x30] sm:$0xff]
    %v1042 = vld [vmem:[%s3 + $0x38] sm:$0xf]
    %v1043 = vld [vmem:[%s3 + $0x3c] sm:$0xff]
    %v1044 = vld [vmem:[%s3 + $0x44] sm:$0xf]
    %v1045 = vld [vmem:[%s3 + $0x48] sm:$0xff]
    %v1046 = vld [vmem:[%s3 + $0x50] sm:$0xf]
    %v1047 = vld [vmem:[%s3 + $0x54] sm:$0xff]
    %v1048 = vld [vmem:[%s3 + $0x5c] sm:$0xf]
    %v1049 = vld [vmem:[%s3 + $0x60] sm:$0xff]
    %v1050 = vld [vmem:[%s3 + $0x68] sm:$0xf]
    %v1051 = vld [vmem:[%s3 + $0x6c] sm:$0xff]
    %v1052 = vld [vmem:[%s3 + $0x74] sm:$0xf]
    %v1053 = vld [vmem:[%s3 + $0x78] sm:$0xff]
    %v1054 = vld [vmem:[%s3 + $0x80] sm:$0xf]
    %v1055 = vld [vmem:[%s3 + $0x84] sm:$0xff]
    %v1056 = vld [vmem:[%s3 + $0x8c] sm:$0xf]
    %v1057 = vld [vmem:[%s3 + $0x90] sm:$0xff]
    %v1058 = vld [vmem:[%s3 + $0x98] sm:$0xf]
    %v1059 = vld [vmem:[%s3 + $0x9c] sm:$0xff]
    %v1060 = vld [vmem:[%s3 + $0xa4] sm:$0xf]
    %v1061 = vld [vmem:[%s3 + $0xa8] sm:$0xff]
    %v1062 = vld [vmem:[%s3 + $0xb0] sm:$0xf]
    %v1063 = vld [vmem:[%s3 + $0xb4] sm:$0xff]
    %v1064 = vld [vmem:[%s3 + $0xbc] sm:$0xf]
    %v1065 = vld [vmem:[%s3 + $0xc0] sm:$0xff]
    %v1066 = vld [vmem:[%s3 + $0xc8] sm:$0xf]
    %v1067 = vld [vmem:[%s3 + $0xcc] sm:$0xff]
    %v1068 = vld [vmem:[%s3 + $0xd4] sm:$0xf]
    %v1069 = vld [vmem:[%s3 + $0xd8] sm:$0xff]
    %v1070 = vld [vmem:[%s3 + $0xe0] sm:$0xf]
    %v1071 = vld [vmem:[%s3 + $0xe4] sm:$0xff]
    %v1072 = vld [vmem:[%s3 + $0xec] sm:$0xf]
    %v1073 = vld [vmem:[%s3 + $0xf0] sm:$0xff]
    %v1074 = vld [vmem:[%s3 + $0xf8] sm:$0xf]
    %v1075 = vld [vmem:[%s3 + $0xfc] sm:$0xff]
    %v1076 = vld [vmem:[%s3 + $0x104] sm:$0xf]
    %v1077 = vld [vmem:[%s3 + $0x108] sm:$0xff]
    %v1078 = vld [vmem:[%s3 + $0x110] sm:$0xf]
    %v1079 = vld [vmem:[%s3 + $0x114] sm:$0xff]
    %v1080 = vld [vmem:[%s3 + $0x11c] sm:$0xf]
    %v1081 = vld [vmem:[%s3 + $0x120] sm:$0xff]
    %v1082 = vld [vmem:[%s3 + $0x128] sm:$0xf]
    %v1083 = vld [vmem:[%s3 + $0x12c] sm:$0xff]
    %v1084 = vld [vmem:[%s3 + $0x134] sm:$0xf]
    %v1085 = vld [vmem:[%s3 + $0x138] sm:$0xff]
    %v1086 = vld [vmem:[%s3 + $0x140] sm:$0xf]
    %v1087 = vld [vmem:[%s3 + $0x144] sm:$0xff]
    %v1088 = vld [vmem:[%s3 + $0x14c] sm:$0xf]
    %v1089 = vld [vmem:[%s3 + $0x150] sm:$0xff]
    %v1090 = vld [vmem:[%s3 + $0x158] sm:$0xf]
    %v1091 = vld [vmem:[%s3 + $0x15c] sm:$0xff]
    %v1092 = vld [vmem:[%s3 + $0x164] sm:$0xf]
    %v1093 = vld [vmem:[%s3 + $0x168] sm:$0xff]
    %v1094 = vld [vmem:[%s3 + $0x170] sm:$0xf]
    %v1095 = vld [vmem:[%s3 + $0x174] sm:$0xff]
    %v1096 = vld [vmem:[%s3 + $0x17c] sm:$0xf]
    %v1097 = vld [vmem:[%s3 + $0x180] sm:$0xff]
    %v1098 = vld [vmem:[%s3 + $0x188] sm:$0xf]
    %v1099 = vld [vmem:[%s3 + $0x18c] sm:$0xff]
    %v1100 = vld [vmem:[%s3 + $0x194] sm:$0xf]
    %v1101 = vld [vmem:[%s3 + $0x198] sm:$0xff]
    %v1102 = vld [vmem:[%s3 + $0x1a0] sm:$0xf]
    %v1103 = vld [vmem:[%s3 + $0x1a4] sm:$0xff]
    %v1104 = vld [vmem:[%s3 + $0x1ac] sm:$0xf]
    %v1105 = vld [vmem:[%s3 + $0x1b0] sm:$0xff]
    %v1106 = vld [vmem:[%s3 + $0x1b8] sm:$0xf]
    %v1107 = vld [vmem:[%s3 + $0x1bc] sm:$0xff]
    %v1108 = vld [vmem:[%s3 + $0x1c4] sm:$0xf]
    %v1109 = vld [vmem:[%s3 + $0x1c8] sm:$0xff]
    %v1110 = vld [vmem:[%s3 + $0x1d0] sm:$0xf]
    %v1111 = vld [vmem:[%s3 + $0x1d4] sm:$0xff]
    %v1112 = vld [vmem:[%s3 + $0x1dc] sm:$0xf]
    %v1113 = vld [vmem:[%s3 + $0x1e0] sm:$0xff]
    %v1114 = vld [vmem:[%s3 + $0x1e8] sm:$0xf]
    %v1115 = vld [vmem:[%s3 + $0x1ec] sm:$0xff]
    %v1116 = vld [vmem:[%s3 + $0x1f4] sm:$0xf]
    %v1117 = vld [vmem:[%s3 + $0x1f8] sm:$0xff]
    %v1118 = vld [vmem:[%s3 + $0x200] sm:$0xf]
    %v1119 = vld [vmem:[%s3 + $0x204] sm:$0xff]
    %v1120 = vld [vmem:[%s3 + $0x20c] sm:$0xf]
    %v1121 = vld [vmem:[%s3 + $0x210] sm:$0xff]
    %v1122 = vld [vmem:[%s3 + $0x218] sm:$0xf]
    %v1123 = vld [vmem:[%s3 + $0x21c] sm:$0xff]
    %v1124 = vld [vmem:[%s3 + $0x224] sm:$0xf]
    %v1125 = vld [vmem:[%s3 + $0x228] sm:$0xff]
    %v1126 = vld [vmem:[%s3 + $0x230] sm:$0xf]
    %v1127 = vld [vmem:[%s3 + $0x234] sm:$0xff]
    %v1128 = vld [vmem:[%s3 + $0x23c] sm:$0xf]
    %v1129 = vld [vmem:[%s3 + $0x240] sm:$0xff]
    %v1130 = vld [vmem:[%s3 + $0x248] sm:$0xf]
    %v1131 = vld [vmem:[%s3 + $0x24c] sm:$0xff]
    %v1132 = vld [vmem:[%s3 + $0x254] sm:$0xf]
    %v1133 = vld [vmem:[%s3 + $0x258] sm:$0xff]
    %v1134 = vld [vmem:[%s3 + $0x260] sm:$0xf]
    %v1135 = vld [vmem:[%s3 + $0x264] sm:$0xff]
    %v1136 = vld [vmem:[%s3 + $0x26c] sm:$0xf]
    %v1137 = vld [vmem:[%s3 + $0x270] sm:$0xff]
    %v1138 = vld [vmem:[%s3 + $0x278] sm:$0xf]
    %v1139 = vld [vmem:[%s3 + $0x27c] sm:$0xff]
    %v1140 = vld [vmem:[%s3 + $0x284] sm:$0xf]
    %v1141 = vld [vmem:[%s3 + $0x288] sm:$0xff]
    %v1142 = vld [vmem:[%s3 + $0x290] sm:$0xf]
    %v1143 = vld [vmem:[%s3 + $0x294] sm:$0xff]
    %v1144 = vld [vmem:[%s3 + $0x29c] sm:$0xf]
    %v1145 = vld [vmem:[%s3 + $0x2a0] sm:$0xff]
    %v1146 = vld [vmem:[%s3 + $0x2a8] sm:$0xf]
    %v1147 = vld [vmem:[%s3 + $0x2ac] sm:$0xff]
    %v1148 = vld [vmem:[%s3 + $0x2b4] sm:$0xf]
    %v1149 = vld [vmem:[%s3 + $0x2b8] sm:$0xff]
    %v1150 = vld [vmem:[%s3 + $0x2c0] sm:$0xf]
    %v1151 = vld [vmem:[%s3 + $0x2c4] sm:$0xff]
    %v1152 = vld [vmem:[%s3 + $0x2cc] sm:$0xf]
    %v1153 = vld [vmem:[%s3 + $0x2d0] sm:$0xff]
    %v1154 = vld [vmem:[%s3 + $0x2d8] sm:$0xf]
    %v1155 = vld [vmem:[%s3 + $0x2dc] sm:$0xff]
    %v1156 = vld [vmem:[%s3 + $0x2e4] sm:$0xf]
    %v1157 = vld [vmem:[%s3 + $0x2e8] sm:$0xff]
    %v1158 = vld [vmem:[%s3 + $0x2f0] sm:$0xf]
    %v1159 = vld [vmem:[%s3 + $0x2f4] sm:$0xff]
    %v1160 = vld [vmem:[%s3 + $0x2fc] sm:$0xf]
    %v1161 = vld [vmem:[%s3 + $0x300] sm:$0xff]
    %v1162 = vld [vmem:[%s3 + $0x308] sm:$0xf]
    %v1163 = vld [vmem:[%s3 + $0x30c] sm:$0xff]
    %v1164 = vld [vmem:[%s3 + $0x314] sm:$0xf]
    %v1165 = vld [vmem:[%s3 + $0x318] sm:$0xff]
    %v1166 = vld [vmem:[%s3 + $0x320] sm:$0xf]
    %v1167 = vld [vmem:[%s3 + $0x324] sm:$0xff]
    %v1168 = vld [vmem:[%s3 + $0x32c] sm:$0xf]
    %v1169 = vld [vmem:[%s3 + $0x330] sm:$0xff]
    %v1170 = vld [vmem:[%s3 + $0x338] sm:$0xf]
    %v1171 = vld [vmem:[%s3 + $0x33c] sm:$0xff]
    %v1172 = vld [vmem:[%s3 + $0x344] sm:$0xf]
    %v1173 = vld [vmem:[%s3 + $0x348] sm:$0xff]
    %v1174 = vld [vmem:[%s3 + $0x350] sm:$0xf]
    %v1175 = vld [vmem:[%s3 + $0x354] sm:$0xff]
    %v1176 = vld [vmem:[%s3 + $0x35c] sm:$0xf]
    %v1177 = vld [vmem:[%s3 + $0x360] sm:$0xff]
    %v1178 = vld [vmem:[%s3 + $0x368] sm:$0xf]
    %v1179 = vld [vmem:[%s3 + $0x36c] sm:$0xff]
    %v1180 = vld [vmem:[%s3 + $0x374] sm:$0xf]
    %v1181 = vld [vmem:[%s3 + $0x378] sm:$0xff]
    %v1182 = vld [vmem:[%s3 + $0x380] sm:$0xf]
    %v1183 = vld [vmem:[%s3 + $0x384] sm:$0xff]
    %v1184 = vld [vmem:[%s3 + $0x38c] sm:$0xf]
    %v1185 = vld [vmem:[%s3 + $0x390] sm:$0xff]
    %v1186 = vld [vmem:[%s3 + $0x398] sm:$0xf]
    %v1187 = vld [vmem:[%s3 + $0x39c] sm:$0xff]
    %v1188 = vld [vmem:[%s3 + $0x3a4] sm:$0xf]
    %v1189 = vld [vmem:[%s3 + $0x3a8] sm:$0xff]
    %v1190 = vld [vmem:[%s3 + $0x3b0] sm:$0xf]
    %v1191 = vld [vmem:[%s3 + $0x3b4] sm:$0xff]
    %v1192 = vld [vmem:[%s3 + $0x3bc] sm:$0xf]
    %v1193 = vld [vmem:[%s3 + $0x3c0] sm:$0xff]
    %v1194 = vld [vmem:[%s3 + $0x3c8] sm:$0xf]
    %v1195 = vld [vmem:[%s3 + $0x3cc] sm:$0xff]
    %v1196 = vld [vmem:[%s3 + $0x3d4] sm:$0xf]
    %v1197 = vld [vmem:[%s3 + $0x3d8] sm:$0xff]
    %v1198 = vld [vmem:[%s3 + $0x3e0] sm:$0xf]
    %v1199 = vld [vmem:[%s3 + $0x3e4] sm:$0xff]
    %v1200 = vld [vmem:[%s3 + $0x3ec] sm:$0xf]
    %v1201 = vld [vmem:[%s3 + $0x3f0] sm:$0xff]
    %v1202 = vld [vmem:[%s3 + $0x3f8] sm:$0xf]
    %v1203 = vld [vmem:[%s3 + $0x3fc] sm:$0xff]
    %v1204 = vld [vmem:[%s3 + $0x404] sm:$0xf]
    %v1205 = vld [vmem:[%s3 + $0x408] sm:$0xff]
    %v1206 = vld [vmem:[%s3 + $0x410] sm:$0xf]
    %v1207 = vld [vmem:[%s3 + $0x414] sm:$0xff]
    %v1208 = vld [vmem:[%s3 + $0x41c] sm:$0xf]
    %v1209 = vld [vmem:[%s3 + $0x420] sm:$0xff]
    %v1210 = vld [vmem:[%s3 + $0x428] sm:$0xf]
    %v1211 = vld [vmem:[%s3 + $0x42c] sm:$0xff]
    %v1212 = vld [vmem:[%s3 + $0x434] sm:$0xf]
    %v1213 = vld [vmem:[%s3 + $0x438] sm:$0xff]
    %v1214 = vld [vmem:[%s3 + $0x440] sm:$0xf]
    %v1215 = vld [vmem:[%s3 + $0x444] sm:$0xff]
    %v1216 = vld [vmem:[%s3 + $0x44c] sm:$0xf]
    %v1217 = vld [vmem:[%s3 + $0x450] sm:$0xff]
    %v1218 = vld [vmem:[%s3 + $0x458] sm:$0xf]
    %v1219 = vld [vmem:[%s3 + $0x45c] sm:$0xff]
    %v1220 = vld [vmem:[%s3 + $0x464] sm:$0xf]
    %v1221 = vld [vmem:[%s3 + $0x468] sm:$0xff]
    %v1222 = vld [vmem:[%s3 + $0x470] sm:$0xf]
    %v1223 = vld [vmem:[%s3 + $0x474] sm:$0xff]
    %v1224 = vld [vmem:[%s3 + $0x47c] sm:$0xf]
    %v1225 = vld [vmem:[%s3 + $0x480] sm:$0xff]
    %v1226 = vld [vmem:[%s3 + $0x488] sm:$0xf]
    %v1227 = vld [vmem:[%s3 + $0x48c] sm:$0xff]
    %v1228 = vld [vmem:[%s3 + $0x494] sm:$0xf]
    %v1229 = vld [vmem:[%s3 + $0x498] sm:$0xff]
    %v1230 = vld [vmem:[%s3 + $0x4a0] sm:$0xf]
    %v1231 = vld [vmem:[%s3 + $0x4a4] sm:$0xff]
    %v1232 = vld [vmem:[%s3 + $0x4ac] sm:$0xf]
    %v1233 = vld [vmem:[%s3 + $0x4b0] sm:$0xff]
    %v1234 = vld [vmem:[%s3 + $0x4b8] sm:$0xf]
    %v1235 = vld [vmem:[%s3 + $0x4bc] sm:$0xff]
    %v1236 = vld [vmem:[%s3 + $0x4c4] sm:$0xf]
    %v1237 = vld [vmem:[%s3 + $0x4c8] sm:$0xff]
    %v1238 = vld [vmem:[%s3 + $0x4d0] sm:$0xf]
    %v1239 = vld [vmem:[%s3 + $0x4d4] sm:$0xff]
    %v1240 = vld [vmem:[%s3 + $0x4dc] sm:$0xf]
    %v1241 = vld [vmem:[%s3 + $0x4e0] sm:$0xff]
    %v1242 = vld [vmem:[%s3 + $0x4e8] sm:$0xf]
    %v1243 = vld [vmem:[%s3 + $0x4ec] sm:$0xff]
    %v1244 = vld [vmem:[%s3 + $0x4f4] sm:$0xf]
    %v1245 = vld [vmem:[%s3 + $0x4f8] sm:$0xff]
    %v1246 = vld [vmem:[%s3 + $0x500] sm:$0xf]
    %v1247 = vld [vmem:[%s3 + $0x504] sm:$0xff]
    %v1248 = vld [vmem:[%s3 + $0x50c] sm:$0xf]
    %v1249 = vld [vmem:[%s3 + $0x510] sm:$0xff]
    %v1250 = vld [vmem:[%s3 + $0x518] sm:$0xf]
    %v1251 = vld [vmem:[%s3 + $0x51c] sm:$0xff]
    %v1252 = vld [vmem:[%s3 + $0x524] sm:$0xf]
    %v1253 = vld [vmem:[%s3 + $0x528] sm:$0xff]
    %v1254 = vld [vmem:[%s3 + $0x530] sm:$0xf]
    %v1255 = vld [vmem:[%s3 + $0x534] sm:$0xff]
    %v1256 = vld [vmem:[%s3 + $0x53c] sm:$0xf]
    %v1257 = vld [vmem:[%s3 + $0x540] sm:$0xff]
    %v1258 = vld [vmem:[%s3 + $0x548] sm:$0xf]
    %v1259 = vld [vmem:[%s3 + $0x54c] sm:$0xff]
    %v1260 = vld [vmem:[%s3 + $0x554] sm:$0xf]
    %v1261 = vld [vmem:[%s3 + $0x558] sm:$0xff]
    %v1262 = vld [vmem:[%s3 + $0x560] sm:$0xf]
    %v1263 = vld [vmem:[%s3 + $0x564] sm:$0xff]
    %v1264 = vld [vmem:[%s3 + $0x56c] sm:$0xf]
    %v1265 = vld [vmem:[%s3 + $0x570] sm:$0xff]
    %v1266 = vld [vmem:[%s3 + $0x578] sm:$0xf]
    %v1267 = vld [vmem:[%s3 + $0x57c] sm:$0xff]
    %v1268 = vld [vmem:[%s3 + $0x584] sm:$0xf]
    %v1269 = vld [vmem:[%s3 + $0x588] sm:$0xff]
    %v1270 = vld [vmem:[%s3 + $0x590] sm:$0xf]
    %v1271 = vld [vmem:[%s3 + $0x594] sm:$0xff]
    %v1272 = vld [vmem:[%s3 + $0x59c] sm:$0xf]
    %v1273 = vld [vmem:[%s3 + $0x5a0] sm:$0xff]
    %v1274 = vld [vmem:[%s3 + $0x5a8] sm:$0xf]
    %v1275 = vld [vmem:[%s3 + $0x5ac] sm:$0xff]
    %v1276 = vld [vmem:[%s3 + $0x5b4] sm:$0xf]
    %v1277 = vld [vmem:[%s3 + $0x5b8] sm:$0xff]
    %v1278 = vld [vmem:[%s3 + $0x5c0] sm:$0xf]
    %v1279 = vld [vmem:[%s3 + $0x5c4] sm:$0xff]
    %v1280 = vld [vmem:[%s3 + $0x5cc] sm:$0xf]
    %v1281 = vld [vmem:[%s3 + $0x5d0] sm:$0xff]
    %v1282 = vld [vmem:[%s3 + $0x5d8] sm:$0xf]
    %v1283 = vld [vmem:[%s3 + $0x5dc] sm:$0xff]
    %v1284 = vld [vmem:[%s3 + $0x5e4] sm:$0xf]
    %v1285 = vld [vmem:[%s3 + $0x5e8] sm:$0xff]
    %v1286 = vld [vmem:[%s3 + $0x5f0] sm:$0xf]
    %v1287 = vld [vmem:[%s3 + $0x5f4] sm:$0xff]
    %v1288 = vld [vmem:[%s3 + $0x5fc] sm:$0xf]
    %v1289 = vld [vmem:[%s4] sm:$0x7]
    %v1291 = vlaneseq
    %v1292 = vshrl.u32 %v1291, 7
    %v1293 = vsub.s32 0, %v1292
    %v1294 = vrot.slane %v1289, %v1293
    %v1295 = vlaneseq
    %v1296 = vshrl.u32 %v1295, 7
    %v1297 = vsub.s32 1, %v1296
    %v1298 = vrot.slane %v1289, %v1297
    %v1299 = vlaneseq
    %v1300 = vshrl.u32 %v1299, 7
    %v1301 = vsub.s32 2, %v1300
    %v1302 = vrot.slane %v1289, %v1301
    %v1562 = vunpack.c.l.b16 %v1033
    %v1563 = vunpack.c.h.b16 %v1033
    %v1564 = vunpack.c.l.b16 %v1034
    %v1565 = vunpack.c.l.b16 %v1035
    %v1566 = vunpack.c.h.b16 %v1035
    %v1567 = vunpack.c.l.b16 %v1036
    %v1568 = vunpack.c.l.b16 %v1037
    %v1569 = vunpack.c.h.b16 %v1037
    %v1570 = vunpack.c.l.b16 %v1038
    %v1571 = vunpack.c.l.b16 %v1039
    %v1572 = vunpack.c.h.b16 %v1039
    %v1573 = vunpack.c.l.b16 %v1040
    %v1574 = vunpack.c.l.b16 %v1041
    %v1575 = vunpack.c.h.b16 %v1041
    %v1576 = vunpack.c.l.b16 %v1042
    %v1577 = vunpack.c.l.b16 %v1043
    %v1578 = vunpack.c.h.b16 %v1043
    %v1579 = vunpack.c.l.b16 %v1044
    %v1580 = vunpack.c.l.b16 %v1045
    %v1581 = vunpack.c.h.b16 %v1045
    %v1582 = vunpack.c.l.b16 %v1046
    %v1583 = vunpack.c.l.b16 %v1047
    %v1584 = vunpack.c.h.b16 %v1047
    %v1585 = vunpack.c.l.b16 %v1048
    %v1586 = vunpack.c.l.b16 %v1049
    %v1587 = vunpack.c.h.b16 %v1049
    %v1588 = vunpack.c.l.b16 %v1050
    %v1589 = vunpack.c.l.b16 %v1051
    %v1590 = vunpack.c.h.b16 %v1051
    %v1591 = vunpack.c.l.b16 %v1052
    %v1592 = vunpack.c.l.b16 %v1053
    %v1593 = vunpack.c.h.b16 %v1053
    %v1594 = vunpack.c.l.b16 %v1054
    %v1595 = vunpack.c.l.b16 %v1055
    %v1596 = vunpack.c.h.b16 %v1055
    %v1597 = vunpack.c.l.b16 %v1056
    %v1598 = vunpack.c.l.b16 %v1057
    %v1599 = vunpack.c.h.b16 %v1057
    %v1600 = vunpack.c.l.b16 %v1058
    %v1601 = vunpack.c.l.b16 %v1059
    %v1602 = vunpack.c.h.b16 %v1059
    %v1603 = vunpack.c.l.b16 %v1060
    %v1604 = vunpack.c.l.b16 %v1061
    %v1605 = vunpack.c.h.b16 %v1061
    %v1606 = vunpack.c.l.b16 %v1062
    %v1607 = vunpack.c.l.b16 %v1063
    %v1608 = vunpack.c.h.b16 %v1063
    %v1609 = vunpack.c.l.b16 %v1064
    %v1610 = vunpack.c.l.b16 %v1065
    %v1611 = vunpack.c.h.b16 %v1065
    %v1612 = vunpack.c.l.b16 %v1066
    %v1613 = vunpack.c.l.b16 %v1067
    %v1614 = vunpack.c.h.b16 %v1067
    %v1615 = vunpack.c.l.b16 %v1068
    %v1616 = vunpack.c.l.b16 %v1069
    %v1617 = vunpack.c.h.b16 %v1069
    %v1618 = vunpack.c.l.b16 %v1070
    %v1619 = vunpack.c.l.b16 %v1071
    %v1620 = vunpack.c.h.b16 %v1071
    %v1621 = vunpack.c.l.b16 %v1072
    %v1622 = vunpack.c.l.b16 %v1073
    %v1623 = vunpack.c.h.b16 %v1073
    %v1624 = vunpack.c.l.b16 %v1074
    %v1625 = vunpack.c.l.b16 %v1075
    %v1626 = vunpack.c.h.b16 %v1075
    %v1627 = vunpack.c.l.b16 %v1076
    %v1628 = vunpack.c.l.b16 %v1077
    %v1629 = vunpack.c.h.b16 %v1077
    %v1630 = vunpack.c.l.b16 %v1078
    %v1631 = vunpack.c.l.b16 %v1079
    %v1632 = vunpack.c.h.b16 %v1079
    %v1633 = vunpack.c.l.b16 %v1080
    %v1634 = vunpack.c.l.b16 %v1081
    %v1635 = vunpack.c.h.b16 %v1081
    %v1636 = vunpack.c.l.b16 %v1082
    %v1637 = vunpack.c.l.b16 %v1083
    %v1638 = vunpack.c.h.b16 %v1083
    %v1639 = vunpack.c.l.b16 %v1084
    %v1640 = vunpack.c.l.b16 %v1085
    %v1641 = vunpack.c.h.b16 %v1085
    %v1642 = vunpack.c.l.b16 %v1086
    %v1643 = vunpack.c.l.b16 %v1087
    %v1644 = vunpack.c.h.b16 %v1087
    %v1645 = vunpack.c.l.b16 %v1088
    %v1646 = vunpack.c.l.b16 %v1089
    %v1647 = vunpack.c.h.b16 %v1089
    %v1648 = vunpack.c.l.b16 %v1090
    %v1649 = vunpack.c.l.b16 %v1091
    %v1650 = vunpack.c.h.b16 %v1091
    %v1651 = vunpack.c.l.b16 %v1092
    %v1652 = vunpack.c.l.b16 %v1093
    %v1653 = vunpack.c.h.b16 %v1093
    %v1654 = vunpack.c.l.b16 %v1094
    %v1655 = vunpack.c.l.b16 %v1095
    %v1656 = vunpack.c.h.b16 %v1095
    %v1657 = vunpack.c.l.b16 %v1096
    %v1658 = vunpack.c.l.b16 %v1097
    %v1659 = vunpack.c.h.b16 %v1097
    %v1660 = vunpack.c.l.b16 %v1098
    %v1661 = vunpack.c.l.b16 %v1099
    %v1662 = vunpack.c.h.b16 %v1099
    %v1663 = vunpack.c.l.b16 %v1100
    %v1664 = vunpack.c.l.b16 %v1101
    %v1665 = vunpack.c.h.b16 %v1101
    %v1666 = vunpack.c.l.b16 %v1102
    %v1667 = vunpack.c.l.b16 %v1103
    %v1668 = vunpack.c.h.b16 %v1103
    %v1669 = vunpack.c.l.b16 %v1104
    %v1670 = vunpack.c.l.b16 %v1105
    %v1671 = vunpack.c.h.b16 %v1105
    %v1672 = vunpack.c.l.b16 %v1106
    %v1673 = vunpack.c.l.b16 %v1107
    %v1674 = vunpack.c.h.b16 %v1107
    %v1675 = vunpack.c.l.b16 %v1108
    %v1676 = vunpack.c.l.b16 %v1109
    %v1677 = vunpack.c.h.b16 %v1109
    %v1678 = vunpack.c.l.b16 %v1110
    %v1679 = vunpack.c.l.b16 %v1111
    %v1680 = vunpack.c.h.b16 %v1111
    %v1681 = vunpack.c.l.b16 %v1112
    %v1682 = vunpack.c.l.b16 %v1113
    %v1683 = vunpack.c.h.b16 %v1113
    %v1684 = vunpack.c.l.b16 %v1114
    %v1685 = vunpack.c.l.b16 %v1115
    %v1686 = vunpack.c.h.b16 %v1115
    %v1687 = vunpack.c.l.b16 %v1116
    %v1688 = vunpack.c.l.b16 %v1117
    %v1689 = vunpack.c.h.b16 %v1117
    %v1690 = vunpack.c.l.b16 %v1118
    %v1691 = vunpack.c.l.b16 %v1119
    %v1692 = vunpack.c.h.b16 %v1119
    %v1693 = vunpack.c.l.b16 %v1120
    %v1694 = vunpack.c.l.b16 %v1121
    %v1695 = vunpack.c.h.b16 %v1121
    %v1696 = vunpack.c.l.b16 %v1122
    %v1697 = vunpack.c.l.b16 %v1123
    %v1698 = vunpack.c.h.b16 %v1123
    %v1699 = vunpack.c.l.b16 %v1124
    %v1700 = vunpack.c.l.b16 %v1125
    %v1701 = vunpack.c.h.b16 %v1125
    %v1702 = vunpack.c.l.b16 %v1126
    %v1703 = vunpack.c.l.b16 %v1127
    %v1704 = vunpack.c.h.b16 %v1127
    %v1705 = vunpack.c.l.b16 %v1128
    %v1706 = vunpack.c.l.b16 %v1129
    %v1707 = vunpack.c.h.b16 %v1129
    %v1708 = vunpack.c.l.b16 %v1130
    %v1709 = vunpack.c.l.b16 %v1131
    %v1710 = vunpack.c.h.b16 %v1131
    %v1711 = vunpack.c.l.b16 %v1132
    %v1712 = vunpack.c.l.b16 %v1133
    %v1713 = vunpack.c.h.b16 %v1133
    %v1714 = vunpack.c.l.b16 %v1134
    %v1715 = vunpack.c.l.b16 %v1135
    %v1716 = vunpack.c.h.b16 %v1135
    %v1717 = vunpack.c.l.b16 %v1136
    %v1718 = vunpack.c.l.b16 %v1137
    %v1719 = vunpack.c.h.b16 %v1137
    %v1720 = vunpack.c.l.b16 %v1138
    %v1721 = vunpack.c.l.b16 %v1139
    %v1722 = vunpack.c.h.b16 %v1139
    %v1723 = vunpack.c.l.b16 %v1140
    %v1724 = vunpack.c.l.b16 %v1141
    %v1725 = vunpack.c.h.b16 %v1141
    %v1726 = vunpack.c.l.b16 %v1142
    %v1727 = vunpack.c.l.b16 %v1143
    %v1728 = vunpack.c.h.b16 %v1143
    %v1729 = vunpack.c.l.b16 %v1144
    %v1730 = vunpack.c.l.b16 %v1145
    %v1731 = vunpack.c.h.b16 %v1145
    %v1732 = vunpack.c.l.b16 %v1146
    %v1733 = vunpack.c.l.b16 %v1147
    %v1734 = vunpack.c.h.b16 %v1147
    %v1735 = vunpack.c.l.b16 %v1148
    %v1736 = vunpack.c.l.b16 %v1149
    %v1737 = vunpack.c.h.b16 %v1149
    %v1738 = vunpack.c.l.b16 %v1150
    %v1739 = vunpack.c.l.b16 %v1151
    %v1740 = vunpack.c.h.b16 %v1151
    %v1741 = vunpack.c.l.b16 %v1152
    %v1742 = vunpack.c.l.b16 %v1153
    %v1743 = vunpack.c.h.b16 %v1153
    %v1744 = vunpack.c.l.b16 %v1154
    %v1745 = vunpack.c.l.b16 %v1155
    %v1746 = vunpack.c.h.b16 %v1155
    %v1747 = vunpack.c.l.b16 %v1156
    %v1748 = vunpack.c.l.b16 %v1157
    %v1749 = vunpack.c.h.b16 %v1157
    %v1750 = vunpack.c.l.b16 %v1158
    %v1751 = vunpack.c.l.b16 %v1159
    %v1752 = vunpack.c.h.b16 %v1159
    %v1753 = vunpack.c.l.b16 %v1160
    %v1754 = vunpack.c.l.b16 %v1161
    %v1755 = vunpack.c.h.b16 %v1161
    %v1756 = vunpack.c.l.b16 %v1162
    %v1757 = vunpack.c.l.b16 %v1163
    %v1758 = vunpack.c.h.b16 %v1163
    %v1759 = vunpack.c.l.b16 %v1164
    %v1760 = vunpack.c.l.b16 %v1165
    %v1761 = vunpack.c.h.b16 %v1165
    %v1762 = vunpack.c.l.b16 %v1166
    %v1763 = vunpack.c.l.b16 %v1167
    %v1764 = vunpack.c.h.b16 %v1167
    %v1765 = vunpack.c.l.b16 %v1168
    %v1766 = vunpack.c.l.b16 %v1169
    %v1767 = vunpack.c.h.b16 %v1169
    %v1768 = vunpack.c.l.b16 %v1170
    %v1769 = vunpack.c.l.b16 %v1171
    %v1770 = vunpack.c.h.b16 %v1171
    %v1771 = vunpack.c.l.b16 %v1172
    %v1772 = vunpack.c.l.b16 %v1173
    %v1773 = vunpack.c.h.b16 %v1173
    %v1774 = vunpack.c.l.b16 %v1174
    %v1775 = vunpack.c.l.b16 %v1175
    %v1776 = vunpack.c.h.b16 %v1175
    %v1777 = vunpack.c.l.b16 %v1176
    %v1778 = vunpack.c.l.b16 %v1177
    %v1779 = vunpack.c.h.b16 %v1177
    %v1780 = vunpack.c.l.b16 %v1178
    %v1781 = vunpack.c.l.b16 %v1179
    %v1782 = vunpack.c.h.b16 %v1179
    %v1783 = vunpack.c.l.b16 %v1180
    %v1784 = vunpack.c.l.b16 %v1181
    %v1785 = vunpack.c.h.b16 %v1181
    %v1786 = vunpack.c.l.b16 %v1182
    %v1787 = vunpack.c.l.b16 %v1183
    %v1788 = vunpack.c.h.b16 %v1183
    %v1789 = vunpack.c.l.b16 %v1184
    %v1790 = vunpack.c.l.b16 %v1185
    %v1791 = vunpack.c.h.b16 %v1185
    %v1792 = vunpack.c.l.b16 %v1186
    %v1793 = vunpack.c.l.b16 %v1187
    %v1794 = vunpack.c.h.b16 %v1187
    %v1795 = vunpack.c.l.b16 %v1188
    %v1796 = vunpack.c.l.b16 %v1189
    %v1797 = vunpack.c.h.b16 %v1189
    %v1798 = vunpack.c.l.b16 %v1190
    %v1799 = vunpack.c.l.b16 %v1191
    %v1800 = vunpack.c.h.b16 %v1191
    %v1801 = vunpack.c.l.b16 %v1192
    %v1802 = vunpack.c.l.b16 %v1193
    %v1803 = vunpack.c.h.b16 %v1193
    %v1804 = vunpack.c.l.b16 %v1194
    %v1805 = vunpack.c.l.b16 %v1195
    %v1806 = vunpack.c.h.b16 %v1195
    %v1807 = vunpack.c.l.b16 %v1196
    %v1808 = vunpack.c.l.b16 %v1197
    %v1809 = vunpack.c.h.b16 %v1197
    %v1810 = vunpack.c.l.b16 %v1198
    %v1811 = vunpack.c.l.b16 %v1199
    %v1812 = vunpack.c.h.b16 %v1199
    %v1813 = vunpack.c.l.b16 %v1200
    %v1814 = vunpack.c.l.b16 %v1201
    %v1815 = vunpack.c.h.b16 %v1201
    %v1816 = vunpack.c.l.b16 %v1202
    %v1817 = vunpack.c.l.b16 %v1203
    %v1818 = vunpack.c.h.b16 %v1203
    %v1819 = vunpack.c.l.b16 %v1204
    %v1820 = vunpack.c.l.b16 %v1205
    %v1821 = vunpack.c.h.b16 %v1205
    %v1822 = vunpack.c.l.b16 %v1206
    %v1823 = vunpack.c.l.b16 %v1207
    %v1824 = vunpack.c.h.b16 %v1207
    %v1825 = vunpack.c.l.b16 %v1208
    %v1826 = vunpack.c.l.b16 %v1209
    %v1827 = vunpack.c.h.b16 %v1209
    %v1828 = vunpack.c.l.b16 %v1210
    %v1829 = vunpack.c.l.b16 %v1211
    %v1830 = vunpack.c.h.b16 %v1211
    %v1831 = vunpack.c.l.b16 %v1212
    %v1832 = vunpack.c.l.b16 %v1213
    %v1833 = vunpack.c.h.b16 %v1213
    %v1834 = vunpack.c.l.b16 %v1214
    %v1835 = vunpack.c.l.b16 %v1215
    %v1836 = vunpack.c.h.b16 %v1215
    %v1837 = vunpack.c.l.b16 %v1216
    %v1838 = vunpack.c.l.b16 %v1217
    %v1839 = vunpack.c.h.b16 %v1217
    %v1840 = vunpack.c.l.b16 %v1218
    %v1841 = vunpack.c.l.b16 %v1219
    %v1842 = vunpack.c.h.b16 %v1219
    %v1843 = vunpack.c.l.b16 %v1220
    %v1844 = vunpack.c.l.b16 %v1221
    %v1845 = vunpack.c.h.b16 %v1221
    %v1846 = vunpack.c.l.b16 %v1222
    %v1847 = vunpack.c.l.b16 %v1223
    %v1848 = vunpack.c.h.b16 %v1223
    %v1849 = vunpack.c.l.b16 %v1224
    %v1850 = vunpack.c.l.b16 %v1225
    %v1851 = vunpack.c.h.b16 %v1225
    %v1852 = vunpack.c.l.b16 %v1226
    %v1853 = vunpack.c.l.b16 %v1227
    %v1854 = vunpack.c.h.b16 %v1227
    %v1855 = vunpack.c.l.b16 %v1228
    %v1856 = vunpack.c.l.b16 %v1229
    %v1857 = vunpack.c.h.b16 %v1229
    %v1858 = vunpack.c.l.b16 %v1230
    %v1859 = vunpack.c.l.b16 %v1231
    %v1860 = vunpack.c.h.b16 %v1231
    %v1861 = vunpack.c.l.b16 %v1232
    %v1862 = vunpack.c.l.b16 %v1233
    %v1863 = vunpack.c.h.b16 %v1233
    %v1864 = vunpack.c.l.b16 %v1234
    %v1865 = vunpack.c.l.b16 %v1235
    %v1866 = vunpack.c.h.b16 %v1235
    %v1867 = vunpack.c.l.b16 %v1236
    %v1868 = vunpack.c.l.b16 %v1237
    %v1869 = vunpack.c.h.b16 %v1237
    %v1870 = vunpack.c.l.b16 %v1238
    %v1871 = vunpack.c.l.b16 %v1239
    %v1872 = vunpack.c.h.b16 %v1239
    %v1873 = vunpack.c.l.b16 %v1240
    %v1874 = vunpack.c.l.b16 %v1241
    %v1875 = vunpack.c.h.b16 %v1241
    %v1876 = vunpack.c.l.b16 %v1242
    %v1877 = vunpack.c.l.b16 %v1243
    %v1878 = vunpack.c.h.b16 %v1243
    %v1879 = vunpack.c.l.b16 %v1244
    %v1880 = vunpack.c.l.b16 %v1245
    %v1881 = vunpack.c.h.b16 %v1245
    %v1882 = vunpack.c.l.b16 %v1246
    %v1883 = vunpack.c.l.b16 %v1247
    %v1884 = vunpack.c.h.b16 %v1247
    %v1885 = vunpack.c.l.b16 %v1248
    %v1886 = vunpack.c.l.b16 %v1249
    %v1887 = vunpack.c.h.b16 %v1249
    %v1888 = vunpack.c.l.b16 %v1250
    %v1889 = vunpack.c.l.b16 %v1251
    %v1890 = vunpack.c.h.b16 %v1251
    %v1891 = vunpack.c.l.b16 %v1252
    %v1892 = vunpack.c.l.b16 %v1253
    %v1893 = vunpack.c.h.b16 %v1253
    %v1894 = vunpack.c.l.b16 %v1254
    %v1895 = vunpack.c.l.b16 %v1255
    %v1896 = vunpack.c.h.b16 %v1255
    %v1897 = vunpack.c.l.b16 %v1256
    %v1898 = vunpack.c.l.b16 %v1257
    %v1899 = vunpack.c.h.b16 %v1257
    %v1900 = vunpack.c.l.b16 %v1258
    %v1901 = vunpack.c.l.b16 %v1259
    %v1902 = vunpack.c.h.b16 %v1259
    %v1903 = vunpack.c.l.b16 %v1260
    %v1904 = vunpack.c.l.b16 %v1261
    %v1905 = vunpack.c.h.b16 %v1261
    %v1906 = vunpack.c.l.b16 %v1262
    %v1907 = vunpack.c.l.b16 %v1263
    %v1908 = vunpack.c.h.b16 %v1263
    %v1909 = vunpack.c.l.b16 %v1264
    %v1910 = vunpack.c.l.b16 %v1265
    %v1911 = vunpack.c.h.b16 %v1265
    %v1912 = vunpack.c.l.b16 %v1266
    %v1913 = vunpack.c.l.b16 %v1267
    %v1914 = vunpack.c.h.b16 %v1267
    %v1915 = vunpack.c.l.b16 %v1268
    %v1916 = vunpack.c.l.b16 %v1269
    %v1917 = vunpack.c.h.b16 %v1269
    %v1918 = vunpack.c.l.b16 %v1270
    %v1919 = vunpack.c.l.b16 %v1271
    %v1920 = vunpack.c.h.b16 %v1271
    %v1921 = vunpack.c.l.b16 %v1272
    %v1922 = vunpack.c.l.b16 %v1273
    %v1923 = vunpack.c.h.b16 %v1273
    %v1924 = vunpack.c.l.b16 %v1274
    %v1925 = vunpack.c.l.b16 %v1275
    %v1926 = vunpack.c.h.b16 %v1275
    %v1927 = vunpack.c.l.b16 %v1276
    %v1928 = vunpack.c.l.b16 %v1277
    %v1929 = vunpack.c.h.b16 %v1277
    %v1930 = vunpack.c.l.b16 %v1278
    %v1931 = vunpack.c.l.b16 %v1279
    %v1932 = vunpack.c.h.b16 %v1279
    %v1933 = vunpack.c.l.b16 %v1280
    %v1934 = vunpack.c.l.b16 %v1281
    %v1935 = vunpack.c.h.b16 %v1281
    %v1936 = vunpack.c.l.b16 %v1282
    %v1937 = vunpack.c.l.b16 %v1283
    %v1938 = vunpack.c.h.b16 %v1283
    %v1939 = vunpack.c.l.b16 %v1284
    %v1940 = vunpack.c.l.b16 %v1285
    %v1941 = vunpack.c.h.b16 %v1285
    %v1942 = vunpack.c.l.b16 %v1286
    %v1943 = vunpack.c.l.b16 %v1287
    %v1944 = vunpack.c.h.b16 %v1287
    %v1945 = vunpack.c.l.b16 %v1288
    %v1946 = vpack.c.b16 %v1565, %v1562
    %v1947 = vpack.c.b16 %v1566, %v1563
    %v1948 = vpack.c.b16 %v1567, %v1564
    %v1949 = vpack.c.b16 %v1571, %v1568
    %v1950 = vpack.c.b16 %v1572, %v1569
    %v1951 = vpack.c.b16 %v1573, %v1570
    %v1952 = vpack.c.b16 %v1577, %v1574
    %v1953 = vpack.c.b16 %v1578, %v1575
    %v1954 = vpack.c.b16 %v1579, %v1576
    %v1955 = vpack.c.b16 %v1583, %v1580
    %v1956 = vpack.c.b16 %v1584, %v1581
    %v1957 = vpack.c.b16 %v1585, %v1582
    %v1958 = vpack.c.b16 %v1589, %v1586
    %v1959 = vpack.c.b16 %v1590, %v1587
    %v1960 = vpack.c.b16 %v1591, %v1588
    %v1961 = vpack.c.b16 %v1595, %v1592
    %v1962 = vpack.c.b16 %v1596, %v1593
    %v1963 = vpack.c.b16 %v1597, %v1594
    %v1964 = vpack.c.b16 %v1601, %v1598
    %v1965 = vpack.c.b16 %v1602, %v1599
    %v1966 = vpack.c.b16 %v1603, %v1600
    %v1967 = vpack.c.b16 %v1607, %v1604
    %v1968 = vpack.c.b16 %v1608, %v1605
    %v1969 = vpack.c.b16 %v1609, %v1606
    %v1970 = vpack.c.b16 %v1613, %v1610
    %v1971 = vpack.c.b16 %v1614, %v1611
    %v1972 = vpack.c.b16 %v1615, %v1612
    %v1973 = vpack.c.b16 %v1619, %v1616
    %v1974 = vpack.c.b16 %v1620, %v1617
    %v1975 = vpack.c.b16 %v1621, %v1618
    %v1976 = vpack.c.b16 %v1625, %v1622
    %v1977 = vpack.c.b16 %v1626, %v1623
    %v1978 = vpack.c.b16 %v1627, %v1624
    %v1979 = vpack.c.b16 %v1631, %v1628
    %v1980 = vpack.c.b16 %v1632, %v1629
    %v1981 = vpack.c.b16 %v1633, %v1630
    %v1982 = vpack.c.b16 %v1637, %v1634
    %v1983 = vpack.c.b16 %v1638, %v1635
    %v1984 = vpack.c.b16 %v1639, %v1636
    %v1985 = vpack.c.b16 %v1643, %v1640
    %v1986 = vpack.c.b16 %v1644, %v1641
    %v1987 = vpack.c.b16 %v1645, %v1642
    %v1988 = vpack.c.b16 %v1649, %v1646
    %v1989 = vpack.c.b16 %v1650, %v1647
    %v1990 = vpack.c.b16 %v1651, %v1648
    %v1991 = vpack.c.b16 %v1655, %v1652
    %v1992 = vpack.c.b16 %v1656, %v1653
    %v1993 = vpack.c.b16 %v1657, %v1654
    %v1994 = vpack.c.b16 %v1661, %v1658
    %v1995 = vpack.c.b16 %v1662, %v1659
    %v1996 = vpack.c.b16 %v1663, %v1660
    %v1997 = vpack.c.b16 %v1667, %v1664
    %v1998 = vpack.c.b16 %v1668, %v1665
    %v1999 = vpack.c.b16 %v1669, %v1666
    %v2000 = vpack.c.b16 %v1673, %v1670
    %v2001 = vpack.c.b16 %v1674, %v1671
    %v2002 = vpack.c.b16 %v1675, %v1672
    %v2003 = vpack.c.b16 %v1679, %v1676
    %v2004 = vpack.c.b16 %v1680, %v1677
    %v2005 = vpack.c.b16 %v1681, %v1678
    %v2006 = vpack.c.b16 %v1685, %v1682
    %v2007 = vpack.c.b16 %v1686, %v1683
    %v2008 = vpack.c.b16 %v1687, %v1684
    %v2009 = vpack.c.b16 %v1691, %v1688
    %v2010 = vpack.c.b16 %v1692, %v1689
    %v2011 = vpack.c.b16 %v1693, %v1690
    %v2012 = vpack.c.b16 %v1697, %v1694
    %v2013 = vpack.c.b16 %v1698, %v1695
    %v2014 = vpack.c.b16 %v1699, %v1696
    %v2015 = vpack.c.b16 %v1703, %v1700
    %v2016 = vpack.c.b16 %v1704, %v1701
    %v2017 = vpack.c.b16 %v1705, %v1702
    %v2018 = vpack.c.b16 %v1709, %v1706
    %v2019 = vpack.c.b16 %v1710, %v1707
    %v2020 = vpack.c.b16 %v1711, %v1708
    %v2021 = vpack.c.b16 %v1715, %v1712
    %v2022 = vpack.c.b16 %v1716, %v1713
    %v2023 = vpack.c.b16 %v1717, %v1714
    %v2024 = vpack.c.b16 %v1721, %v1718
    %v2025 = vpack.c.b16 %v1722, %v1719
    %v2026 = vpack.c.b16 %v1723, %v1720
    %v2027 = vpack.c.b16 %v1727, %v1724
    %v2028 = vpack.c.b16 %v1728, %v1725
    %v2029 = vpack.c.b16 %v1729, %v1726
    %v2030 = vpack.c.b16 %v1733, %v1730
    %v2031 = vpack.c.b16 %v1734, %v1731
    %v2032 = vpack.c.b16 %v1735, %v1732
    %v2033 = vpack.c.b16 %v1739, %v1736
    %v2034 = vpack.c.b16 %v1740, %v1737
    %v2035 = vpack.c.b16 %v1741, %v1738
    %v2036 = vpack.c.b16 %v1745, %v1742
    %v2037 = vpack.c.b16 %v1746, %v1743
    %v2038 = vpack.c.b16 %v1747, %v1744
    %v2039 = vpack.c.b16 %v1751, %v1748
    %v2040 = vpack.c.b16 %v1752, %v1749
    %v2041 = vpack.c.b16 %v1753, %v1750
    %v2042 = vpack.c.b16 %v1757, %v1754
    %v2043 = vpack.c.b16 %v1758, %v1755
    %v2044 = vpack.c.b16 %v1759, %v1756
    %v2045 = vpack.c.b16 %v1763, %v1760
    %v2046 = vpack.c.b16 %v1764, %v1761
    %v2047 = vpack.c.b16 %v1765, %v1762
    %v2048 = vpack.c.b16 %v1769, %v1766
    %v2049 = vpack.c.b16 %v1770, %v1767
    %v2050 = vpack.c.b16 %v1771, %v1768
    %v2051 = vpack.c.b16 %v1775, %v1772
    %v2052 = vpack.c.b16 %v1776, %v1773
    %v2053 = vpack.c.b16 %v1777, %v1774
    %v2054 = vpack.c.b16 %v1781, %v1778
    %v2055 = vpack.c.b16 %v1782, %v1779
    %v2056 = vpack.c.b16 %v1783, %v1780
    %v2057 = vpack.c.b16 %v1787, %v1784
    %v2058 = vpack.c.b16 %v1788, %v1785
    %v2059 = vpack.c.b16 %v1789, %v1786
    %v2060 = vpack.c.b16 %v1793, %v1790
    %v2061 = vpack.c.b16 %v1794, %v1791
    %v2062 = vpack.c.b16 %v1795, %v1792
    %v2063 = vpack.c.b16 %v1799, %v1796
    %v2064 = vpack.c.b16 %v1800, %v1797
    %v2065 = vpack.c.b16 %v1801, %v1798
    %v2066 = vpack.c.b16 %v1805, %v1802
    %v2067 = vpack.c.b16 %v1806, %v1803
    %v2068 = vpack.c.b16 %v1807, %v1804
    %v2069 = vpack.c.b16 %v1811, %v1808
    %v2070 = vpack.c.b16 %v1812, %v1809
    %v2071 = vpack.c.b16 %v1813, %v1810
    %v2072 = vpack.c.b16 %v1817, %v1814
    %v2073 = vpack.c.b16 %v1818, %v1815
    %v2074 = vpack.c.b16 %v1819, %v1816
    %v2075 = vpack.c.b16 %v1823, %v1820
    %v2076 = vpack.c.b16 %v1824, %v1821
    %v2077 = vpack.c.b16 %v1825, %v1822
    %v2078 = vpack.c.b16 %v1829, %v1826
    %v2079 = vpack.c.b16 %v1830, %v1827
    %v2080 = vpack.c.b16 %v1831, %v1828
    %v2081 = vpack.c.b16 %v1835, %v1832
    %v2082 = vpack.c.b16 %v1836, %v1833
    %v2083 = vpack.c.b16 %v1837, %v1834
    %v2084 = vpack.c.b16 %v1841, %v1838
    %v2085 = vpack.c.b16 %v1842, %v1839
    %v2086 = vpack.c.b16 %v1843, %v1840
    %v2087 = vpack.c.b16 %v1847, %v1844
    %v2088 = vpack.c.b16 %v1848, %v1845
    %v2089 = vpack.c.b16 %v1849, %v1846
    %v2090 = vpack.c.b16 %v1853, %v1850
    %v2091 = vpack.c.b16 %v1854, %v1851
    %v2092 = vpack.c.b16 %v1855, %v1852
    %v2093 = vpack.c.b16 %v1859, %v1856
    %v2094 = vpack.c.b16 %v1860, %v1857
    %v2095 = vpack.c.b16 %v1861, %v1858
    %v2096 = vpack.c.b16 %v1865, %v1862
    %v2097 = vpack.c.b16 %v1866, %v1863
    %v2098 = vpack.c.b16 %v1867, %v1864
    %v2099 = vpack.c.b16 %v1871, %v1868
    %v2100 = vpack.c.b16 %v1872, %v1869
    %v2101 = vpack.c.b16 %v1873, %v1870
    %v2102 = vpack.c.b16 %v1877, %v1874
    %v2103 = vpack.c.b16 %v1878, %v1875
    %v2104 = vpack.c.b16 %v1879, %v1876
    %v2105 = vpack.c.b16 %v1883, %v1880
    %v2106 = vpack.c.b16 %v1884, %v1881
    %v2107 = vpack.c.b16 %v1885, %v1882
    %v2108 = vpack.c.b16 %v1889, %v1886
    %v2109 = vpack.c.b16 %v1890, %v1887
    %v2110 = vpack.c.b16 %v1891, %v1888
    %v2111 = vpack.c.b16 %v1895, %v1892
    %v2112 = vpack.c.b16 %v1896, %v1893
    %v2113 = vpack.c.b16 %v1897, %v1894
    %v2114 = vpack.c.b16 %v1901, %v1898
    %v2115 = vpack.c.b16 %v1902, %v1899
    %v2116 = vpack.c.b16 %v1903, %v1900
    %v2117 = vpack.c.b16 %v1907, %v1904
    %v2118 = vpack.c.b16 %v1908, %v1905
    %v2119 = vpack.c.b16 %v1909, %v1906
    %v2120 = vpack.c.b16 %v1913, %v1910
    %v2121 = vpack.c.b16 %v1914, %v1911
    %v2122 = vpack.c.b16 %v1915, %v1912
    %v2123 = vpack.c.b16 %v1919, %v1916
    %v2124 = vpack.c.b16 %v1920, %v1917
    %v2125 = vpack.c.b16 %v1921, %v1918
    %v2126 = vpack.c.b16 %v1925, %v1922
    %v2127 = vpack.c.b16 %v1926, %v1923
    %v2128 = vpack.c.b16 %v1927, %v1924
    %v2129 = vpack.c.b16 %v1931, %v1928
    %v2130 = vpack.c.b16 %v1932, %v1929
    %v2131 = vpack.c.b16 %v1933, %v1930
    %v2132 = vpack.c.b16 %v1937, %v1934
    %v2133 = vpack.c.b16 %v1938, %v1935
    %v2134 = vpack.c.b16 %v1939, %v1936
    %v2135 = vpack.c.b16 %v1943, %v1940
    %v2136 = vpack.c.b16 %v1944, %v1941
    %v2137 = vpack.c.b16 %v1945, %v1942
    %2330 = vmatprep.subr.bf16.mxu0 %v1968
    %2331 = vmatpush1.bf16.msra.mxu0 %v1967
    %2332 = vmatprep.subr.bf16.mxu0 %v1965
    %2333 = vmatpush1.bf16.msra.mxu0 %v1964
    %2334 = vmatprep.subr.bf16.mxu0 %v1962
    %2335 = vmatpush1.bf16.msra.mxu0 %v1961
    %2336 = vmatprep.subr.bf16.mxu0 %v1959
    %2337 = vmatpush1.bf16.msra.mxu0 %v1958
    %2338 = vmatprep.subr.bf16.mxu0 %v1956
    %2339 = vmatpush1.bf16.msra.mxu0 %v1955
    %2340 = vmatprep.subr.bf16.mxu0 %v1953
    %2341 = vmatpush1.bf16.msra.mxu0 %v1952
    %2342 = vmatprep.subr.bf16.mxu0 %v1950
    %2343 = vmatpush1.bf16.msra.mxu0 %v1949
    %2344 = vmatprep.subr.bf16.mxu0 %v1947
    %2345 = vmatpush1.bf16.msra.mxu0 %v1946
    %2346 = vmatprep.subr.bf16.mxu0 %v1992
    %2347 = vmatpush2.bf16.msra.mxu0 %v1991
    %2348 = vmatprep.subr.bf16.mxu0 %v1989
    %2349 = vmatpush2.bf16.msra.mxu0 %v1988
    %2350 = vmatprep.subr.bf16.mxu0 %v1986
    %2351 = vmatpush2.bf16.msra.mxu0 %v1985
    %2352 = vmatprep.subr.bf16.mxu0 %v1983
    %2353 = vmatpush2.bf16.msra.mxu0 %v1982
    %2354 = vmatprep.subr.bf16.mxu0 %v1980
    %2355 = vmatpush2.bf16.msra.mxu0 %v1979
    %2356 = vmatprep.subr.bf16.mxu0 %v1977
    %2357 = vmatpush2.bf16.msra.mxu0 %v1976
    %2358 = vmatprep.subr.bf16.mxu0 %v1974
    %2359 = vmatpush2.bf16.msra.mxu0 %v1973
    %2360 = vmatprep.subr.bf16.mxu0 %v1971
    %2361 = vmatpush2.bf16.msra.mxu0 %v1970
    %2362 = vmatprep.mubr.bf16.mxu0 %v1026
    %2363 = vmatmul.mubr.bf16.gmra.mxu0 %v1025
    %v2364 = vpop.f32.mrf.mxu0
    %v2365 = vadd.f32 %v1294, %v2364
    %v2366 = vpop.f32.mrf.mxu0
    %v2367 = vadd.f32 %v1298, %v2366
    %v2368 = vpop.f32.mrf.mxu0
    %v2369 = vadd.f32 %v1294, %v2368
    %v2370 = vpop.f32.mrf.mxu0
    %v2371 = vadd.f32 %v1298, %v2370
    %2372 = vdwg.mxu0
    %2373 = vmatprep.subr.bf16.mxu0 %v2016
    %2374 = vmatpush1.bf16.msra.mxu0 %v2015
    %2375 = vmatprep.subr.bf16.mxu0 %v2013
    %2376 = vmatpush1.bf16.msra.mxu0 %v2012
    %2377 = vmatprep.subr.bf16.mxu0 %v2010
    %2378 = vmatpush1.bf16.msra.mxu0 %v2009
    %2379 = vmatprep.subr.bf16.mxu0 %v2007
    %2380 = vmatpush1.bf16.msra.mxu0 %v2006
    %2381 = vmatprep.subr.bf16.mxu0 %v2004
    %2382 = vmatpush1.bf16.msra.mxu0 %v2003
    %2383 = vmatprep.subr.bf16.mxu0 %v2001
    %2384 = vmatpush1.bf16.msra.mxu0 %v2000
    %2385 = vmatprep.subr.bf16.mxu0 %v1998
    %2386 = vmatpush1.bf16.msra.mxu0 %v1997
    %2387 = vmatprep.subr.bf16.mxu0 %v1995
    %2388 = vmatpush1.bf16.msra.mxu0 %v1994
    %2389 = vmatprep.subr.bf16.mxu0 %v2040
    %2390 = vmatpush2.bf16.msra.mxu0 %v2039
    %2391 = vmatprep.subr.bf16.mxu0 %v2037
    %2392 = vmatpush2.bf16.msra.mxu0 %v2036
    %2393 = vmatprep.subr.bf16.mxu0 %v2034
    %2394 = vmatpush2.bf16.msra.mxu0 %v2033
    %2395 = vmatprep.subr.bf16.mxu0 %v2031
    %2396 = vmatpush2.bf16.msra.mxu0 %v2030
    %2397 = vmatprep.subr.bf16.mxu0 %v2028
    %2398 = vmatpush2.bf16.msra.mxu0 %v2027
    %2399 = vmatprep.subr.bf16.mxu0 %v2025
    %2400 = vmatpush2.bf16.msra.mxu0 %v2024
    %2401 = vmatprep.subr.bf16.mxu0 %v2022
    %2402 = vmatpush2.bf16.msra.mxu0 %v2021
    %2403 = vmatprep.subr.bf16.mxu0 %v2019
    %2404 = vmatpush2.bf16.msra.mxu0 %v2018
    %2405 = vmatprep.mubr.bf16.mxu0 %v1028
    %2406 = vmatmul.mubr.bf16.gmra.mxu0 %v1027
    %v2407 = vpop.f32.mrf.mxu0
    %v2408 = vadd.f32 %v2365, %v2407
    %v2409 = vpop.f32.mrf.mxu0
    %v2410 = vadd.f32 %v2367, %v2409
    %v2411 = vpop.f32.mrf.mxu0
    %v2412 = vadd.f32 %v2369, %v2411
    %v2413 = vpop.f32.mrf.mxu0
    %v2414 = vadd.f32 %v2371, %v2413
    %2415 = vdwg.mxu0
    %2416 = vmatprep.subr.bf16.mxu0 %v2064
    %2417 = vmatpush1.bf16.msra.mxu0 %v2063
    %2418 = vmatprep.subr.bf16.mxu0 %v2061
    %2419 = vmatpush1.bf16.msra.mxu0 %v2060
    %2420 = vmatprep.subr.bf16.mxu0 %v2058
    %2421 = vmatpush1.bf16.msra.mxu0 %v2057
    %2422 = vmatprep.subr.bf16.mxu0 %v2055
    %2423 = vmatpush1.bf16.msra.mxu0 %v2054
    %2424 = vmatprep.subr.bf16.mxu0 %v2052
    %2425 = vmatpush1.bf16.msra.mxu0 %v2051
    %2426 = vmatprep.subr.bf16.mxu0 %v2049
    %2427 = vmatpush1.bf16.msra.mxu0 %v2048
    %2428 = vmatprep.subr.bf16.mxu0 %v2046
    %2429 = vmatpush1.bf16.msra.mxu0 %v2045
    %2430 = vmatprep.subr.bf16.mxu0 %v2043
    %2431 = vmatpush1.bf16.msra.mxu0 %v2042
    %2432 = vmatprep.subr.bf16.mxu0 %v2088
    %2433 = vmatpush2.bf16.msra.mxu0 %v2087
    %2434 = vmatprep.subr.bf16.mxu0 %v2085
    %2435 = vmatpush2.bf16.msra.mxu0 %v2084
    %2436 = vmatprep.subr.bf16.mxu0 %v2082
    %2437 = vmatpush2.bf16.msra.mxu0 %v2081
    %2438 = vmatprep.subr.bf16.mxu0 %v2079
    %2439 = vmatpush2.bf16.msra.mxu0 %v2078
    %2440 = vmatprep.subr.bf16.mxu0 %v2076
    %2441 = vmatpush2.bf16.msra.mxu0 %v2075
    %2442 = vmatprep.subr.bf16.mxu0 %v2073
    %2443 = vmatpush2.bf16.msra.mxu0 %v2072
    %2444 = vmatprep.subr.bf16.mxu0 %v2070
    %2445 = vmatpush2.bf16.msra.mxu0 %v2069
    %2446 = vmatprep.subr.bf16.mxu0 %v2067
    %2447 = vmatpush2.bf16.msra.mxu0 %v2066
    %2448 = vmatprep.mubr.bf16.mxu0 %v1030
    %2449 = vmatmul.mubr.bf16.gmra.mxu0 %v1029
    %v2450 = vpop.f32.mrf.mxu0
    %v2451 = vadd.f32 %v2408, %v2450
    %v2452 = vpop.f32.mrf.mxu0
    %v2453 = vadd.f32 %v2410, %v2452
    %v2454 = vpop.f32.mrf.mxu0
    %v2455 = vadd.f32 %v2412, %v2454
    %v2456 = vpop.f32.mrf.mxu0
    %v2457 = vadd.f32 %v2414, %v2456
    %2458 = vdwg.mxu0
    %2459 = vmatprep.subr.bf16.mxu0 %v2112
    %2460 = vmatpush1.bf16.msra.mxu0 %v2111
    %2461 = vmatprep.subr.bf16.mxu0 %v2109
    %2462 = vmatpush1.bf16.msra.mxu0 %v2108
    %2463 = vmatprep.subr.bf16.mxu0 %v2106
    %2464 = vmatpush1.bf16.msra.mxu0 %v2105
    %2465 = vmatprep.subr.bf16.mxu0 %v2103
    %2466 = vmatpush1.bf16.msra.mxu0 %v2102
    %2467 = vmatprep.subr.bf16.mxu0 %v2100
    %2468 = vmatpush1.bf16.msra.mxu0 %v2099
    %2469 = vmatprep.subr.bf16.mxu0 %v2097
    %2470 = vmatpush1.bf16.msra.mxu0 %v2096
    %2471 = vmatprep.subr.bf16.mxu0 %v2094
    %2472 = vmatpush1.bf16.msra.mxu0 %v2093
    %2473 = vmatprep.subr.bf16.mxu0 %v2091
    %2474 = vmatpush1.bf16.msra.mxu0 %v2090
    %2475 = vmatprep.subr.bf16.mxu0 %v2136
    %2476 = vmatpush2.bf16.msra.mxu0 %v2135
    %2477 = vmatprep.subr.bf16.mxu0 %v2133
    %2478 = vmatpush2.bf16.msra.mxu0 %v2132
    %2479 = vmatprep.subr.bf16.mxu0 %v2130
    %2480 = vmatpush2.bf16.msra.mxu0 %v2129
    %2481 = vmatprep.subr.bf16.mxu0 %v2127
    %2482 = vmatpush2.bf16.msra.mxu0 %v2126
    %2483 = vmatprep.subr.bf16.mxu0 %v2124
    %2484 = vmatpush2.bf16.msra.mxu0 %v2123
    %2485 = vmatprep.subr.bf16.mxu0 %v2121
    %2486 = vmatpush2.bf16.msra.mxu0 %v2120
    %2487 = vmatprep.subr.bf16.mxu0 %v2118
    %2488 = vmatpush2.bf16.msra.mxu0 %v2117
    %2489 = vmatprep.subr.bf16.mxu0 %v2115
    %2490 = vmatpush2.bf16.msra.mxu0 %v2114
    %2491 = vmatprep.mubr.bf16.mxu0 %v1032
    %2492 = vmatmul.mubr.bf16.gmra.mxu0 %v1031
    %v2493 = vpop.f32.mrf.mxu0
    %v2494 = vadd.f32 %v2451, %v2493
    %v2495 = vpop.f32.mrf.mxu0
    %v2496 = vadd.f32 %v2453, %v2495
    %v2497 = vpop.f32.mrf.mxu0
    %v2498 = vadd.f32 %v2455, %v2497
    %v2499 = vpop.f32.mrf.mxu0
    %v2500 = vadd.f32 %v2457, %v2499
    %2501 = vdwg.mxu0
    %2502 = vmatprep.subr.bf16.mxu0 0
    %2503 = vmatpush1.bf16.msra.mxu0 %v1969
    %2504 = vmatprep.subr.bf16.mxu0 0
    %2505 = vmatpush1.bf16.msra.mxu0 %v1966
    %2506 = vmatprep.subr.bf16.mxu0 0
    %2507 = vmatpush1.bf16.msra.mxu0 %v1963
    %2508 = vmatprep.subr.bf16.mxu0 0
    %2509 = vmatpush1.bf16.msra.mxu0 %v1960
    %2510 = vmatprep.subr.bf16.mxu0 0
    %2511 = vmatpush1.bf16.msra.mxu0 %v1957
    %2512 = vmatprep.subr.bf16.mxu0 0
    %2513 = vmatpush1.bf16.msra.mxu0 %v1954
    %2514 = vmatprep.subr.bf16.mxu0 0
    %2515 = vmatpush1.bf16.msra.mxu0 %v1951
    %2516 = vmatprep.subr.bf16.mxu0 0
    %2517 = vmatpush1.bf16.msra.mxu0 %v1948
    %2518 = vmatprep.subr.bf16.mxu0 0
    %2519 = vmatpush2.bf16.msra.mxu0 %v1993
    %2520 = vmatprep.subr.bf16.mxu0 0
    %2521 = vmatpush2.bf16.msra.mxu0 %v1990
    %2522 = vmatprep.subr.bf16.mxu0 0
    %2523 = vmatpush2.bf16.msra.mxu0 %v1987
    %2524 = vmatprep.subr.bf16.mxu0 0
    %2525 = vmatpush2.bf16.msra.mxu0 %v1984
    %2526 = vmatprep.subr.bf16.mxu0 0
    %2527 = vmatpush2.bf16.msra.mxu0 %v1981
    %2528 = vmatprep.subr.bf16.mxu0 0
    %2529 = vmatpush2.bf16.msra.mxu0 %v1978
    %2530 = vmatprep.subr.bf16.mxu0 0
    %2531 = vmatpush2.bf16.msra.mxu0 %v1975
    %2532 = vmatprep.subr.bf16.mxu0 0
    %2533 = vmatpush2.bf16.msra.mxu0 %v1972
    %2534 = vmatprep.mubr.bf16.mxu0 %v1026
    %2535 = vmatmul.mubr.bf16.gmra.mxu0 %v1025
    %v2536 = vpop.f32.mrf.mxu0
    %v2537 = vadd.f32 %v1302, %v2536
    %v2538 = vpop.f32.mrf.mxu0
    %v2539 = vpop.f32.mrf.mxu0
    %v2540 = vadd.f32 %v1302, %v2539
    %v2541 = vpop.f32.mrf.mxu0
    %2542 = vdwg.mxu0
    %2543 = vmatprep.subr.bf16.mxu0 0
    %2544 = vmatpush1.bf16.msra.mxu0 %v2017
    %2545 = vmatprep.subr.bf16.mxu0 0
    %2546 = vmatpush1.bf16.msra.mxu0 %v2014
    %2547 = vmatprep.subr.bf16.mxu0 0
    %2548 = vmatpush1.bf16.msra.mxu0 %v2011
    %2549 = vmatprep.subr.bf16.mxu0 0
    %2550 = vmatpush1.bf16.msra.mxu0 %v2008
    %2551 = vmatprep.subr.bf16.mxu0 0
    %2552 = vmatpush1.bf16.msra.mxu0 %v2005
    %2553 = vmatprep.subr.bf16.mxu0 0
    %2554 = vmatpush1.bf16.msra.mxu0 %v2002
    %2555 = vmatprep.subr.bf16.mxu0 0
    %2556 = vmatpush1.bf16.msra.mxu0 %v1999
    %2557 = vmatprep.subr.bf16.mxu0 0
    %2558 = vmatpush1.bf16.msra.mxu0 %v1996
    %2559 = vmatprep.subr.bf16.mxu0 0
    %2560 = vmatpush2.bf16.msra.mxu0 %v2041
    %2561 = vmatprep.subr.bf16.mxu0 0
    %2562 = vmatpush2.bf16.msra.mxu0 %v2038
    %2563 = vmatprep.subr.bf16.mxu0 0
    %2564 = vmatpush2.bf16.msra.mxu0 %v2035
    %2565 = vmatprep.subr.bf16.mxu0 0
    %2566 = vmatpush2.bf16.msra.mxu0 %v2032
    %2567 = vmatprep.subr.bf16.mxu0 0
    %2568 = vmatpush2.bf16.msra.mxu0 %v2029
    %2569 = vmatprep.subr.bf16.mxu0 0
    %2570 = vmatpush2.bf16.msra.mxu0 %v2026
    %2571 = vmatprep.subr.bf16.mxu0 0
    %2572 = vmatpush2.bf16.msra.mxu0 %v2023
    %2573 = vmatprep.subr.bf16.mxu0 0
    %2574 = vmatpush2.bf16.msra.mxu0 %v2020
    %2575 = vmatprep.mubr.bf16.mxu0 %v1028
    %2576 = vmatmul.mubr.bf16.gmra.mxu0 %v1027
    %v2577 = vpop.f32.mrf.mxu0
    %v2578 = vadd.f32 %v2537, %v2577
    %v2579 = vpop.f32.mrf.mxu0
    %v2580 = vpop.f32.mrf.mxu0
    %v2581 = vadd.f32 %v2540, %v2580
    %v2582 = vpop.f32.mrf.mxu0
    %2583 = vdwg.mxu0
    %2584 = vmatprep.subr.bf16.mxu0 0
    %2585 = vmatpush1.bf16.msra.mxu0 %v2065
    %2586 = vmatprep.subr.bf16.mxu0 0
    %2587 = vmatpush1.bf16.msra.mxu0 %v2062
    %2588 = vmatprep.subr.bf16.mxu0 0
    %2589 = vmatpush1.bf16.msra.mxu0 %v2059
    %2590 = vmatprep.subr.bf16.mxu0 0
    %2591 = vmatpush1.bf16.msra.mxu0 %v2056
    %2592 = vmatprep.subr.bf16.mxu0 0
    %2593 = vmatpush1.bf16.msra.mxu0 %v2053
    %2594 = vmatprep.subr.bf16.mxu0 0
    %2595 = vmatpush1.bf16.msra.mxu0 %v2050
    %2596 = vmatprep.subr.bf16.mxu0 0
    %2597 = vmatpush1.bf16.msra.mxu0 %v2047
    %2598 = vmatprep.subr.bf16.mxu0 0
    %2599 = vmatpush1.bf16.msra.mxu0 %v2044
    %2600 = vmatprep.subr.bf16.mxu0 0
    %2601 = vmatpush2.bf16.msra.mxu0 %v2089
    %2602 = vmatprep.subr.bf16.mxu0 0
    %2603 = vmatpush2.bf16.msra.mxu0 %v2086
    %2604 = vmatprep.subr.bf16.mxu0 0
    %2605 = vmatpush2.bf16.msra.mxu0 %v2083
    %2606 = vmatprep.subr.bf16.mxu0 0
    %2607 = vmatpush2.bf16.msra.mxu0 %v2080
    %2608 = vmatprep.subr.bf16.mxu0 0
    %2609 = vmatpush2.bf16.msra.mxu0 %v2077
    %2610 = vmatprep.subr.bf16.mxu0 0
    %2611 = vmatpush2.bf16.msra.mxu0 %v2074
    %2612 = vmatprep.subr.bf16.mxu0 0
    %2613 = vmatpush2.bf16.msra.mxu0 %v2071
    %2614 = vmatprep.subr.bf16.mxu0 0
    %2615 = vmatpush2.bf16.msra.mxu0 %v2068
    %2616 = vmatprep.mubr.bf16.mxu0 %v1030
    %2617 = vmatmul.mubr.bf16.gmra.mxu0 %v1029
    %v2618 = vpop.f32.mrf.mxu0
    %v2619 = vadd.f32 %v2578, %v2618
    %v2620 = vpop.f32.mrf.mxu0
    %v2621 = vpop.f32.mrf.mxu0
    %v2622 = vadd.f32 %v2581, %v2621
    %v2623 = vpop.f32.mrf.mxu0
    %2624 = vdwg.mxu0
    %2625 = vmatprep.subr.bf16.mxu0 0
    %2626 = vmatpush1.bf16.msra.mxu0 %v2113
    %2627 = vmatprep.subr.bf16.mxu0 0
    %2628 = vmatpush1.bf16.msra.mxu0 %v2110
    %2629 = vmatprep.subr.bf16.mxu0 0
    %2630 = vmatpush1.bf16.msra.mxu0 %v2107
    %2631 = vmatprep.subr.bf16.mxu0 0
    %2632 = vmatpush1.bf16.msra.mxu0 %v2104
    %2633 = vmatprep.subr.bf16.mxu0 0
    %2634 = vmatpush1.bf16.msra.mxu0 %v2101
    %2635 = vmatprep.subr.bf16.mxu0 0
    %2636 = vmatpush1.bf16.msra.mxu0 %v2098
    %2637 = vmatprep.subr.bf16.mxu0 0
    %2638 = vmatpush1.bf16.msra.mxu0 %v2095
    %2639 = vmatprep.subr.bf16.mxu0 0
    %2640 = vmatpush1.bf16.msra.mxu0 %v2092
    %2641 = vmatprep.subr.bf16.mxu0 0
    %2642 = vmatpush2.bf16.msra.mxu0 %v2137
    %2643 = vmatprep.subr.bf16.mxu0 0
    %2644 = vmatpush2.bf16.msra.mxu0 %v2134
    %2645 = vmatprep.subr.bf16.mxu0 0
    %2646 = vmatpush2.bf16.msra.mxu0 %v2131
    %2647 = vmatprep.subr.bf16.mxu0 0
    %2648 = vmatpush2.bf16.msra.mxu0 %v2128
    %2649 = vmatprep.subr.bf16.mxu0 0
    %2650 = vmatpush2.bf16.msra.mxu0 %v2125
    %2651 = vmatprep.subr.bf16.mxu0 0
    %2652 = vmatpush2.bf16.msra.mxu0 %v2122
    %2653 = vmatprep.subr.bf16.mxu0 0
    %2654 = vmatpush2.bf16.msra.mxu0 %v2119
    %2655 = vmatprep.subr.bf16.mxu0 0
    %2656 = vmatpush2.bf16.msra.mxu0 %v2116
    %2657 = vmatprep.mubr.bf16.mxu0 %v1032
    %2658 = vmatmul.mubr.bf16.gmra.mxu0 %v1031
    %v2659 = vpop.f32.mrf.mxu0
    %v2660 = vadd.f32 %v2619, %v2659
    %v2661 = vpop.f32.mrf.mxu0
    %v2662 = vpop.f32.mrf.mxu0
    %v2663 = vadd.f32 %v2622, %v2662
    %v2664 = vpop.f32.mrf.mxu0
    %2665 = vdwg.mxu0
    %v2666 = vtanh.pop %v2494
    %v2667 = vtanh.pop %v2496
    %v2668 = vtanh.pop %v2660
    %v2669 = vtanh.pop %v2498
    %v2670 = vtanh.pop %v2500
    %v2671 = vtanh.pop %v2663
    %v2672 = vmul.f32 %v2666, 0.1
    %v2673 = vmul.f32 %v2667, 0.1
    %v2674 = vmul.f32 %v2668, 0.1
    %v2675 = vmul.f32 %v2669, 0.1
    %v2676 = vmul.f32 %v2670, 0.1
    %v2677 = vmul.f32 %v2671, 0.1
    %2678 = vst [vmem:[#allocation2] sm:$0xff] %v2672
    %2679 = vst [vmem:[#allocation2 + $0x8] sm:$0xff] %v2673
    %2680 = vst [vmem:[#allocation2 + $0x10] sm:$0xff] %v2674
    %2681 = vst [vmem:[#allocation2 + $0x18] sm:$0xff] %v2675
    %2682 = vst [vmem:[#allocation2 + $0x20] sm:$0xff] %v2676
    %2683 = vst [vmem:[#allocation2 + $0x28] sm:$0xff] %v2677
    // Predicated region
    $region22: #{offset_predictor.1} parent=1 // pred_check
      _
    $region23: #{offset_predictor.1} parent=1 // pred_check_branch
      %2685 = sbr.rel (0) target = $region25
    $region24: #{offset_predictor.1} parent=1 // pred_region
      // Predicated region
      $region26: #{offset_predictor.1} parent=24 // pred_check
        _
      $region27: #{offset_predictor.1} parent=24 // pred_check_branch
        %2687 = sbr.rel (0) target = $region29
      $region28: #{offset_predictor.1} parent=24 // pred_region
        // Predicated region
        $region30: #{offset_predictor.1} parent=28 // pred_check
          _
        $region31: #{offset_predictor.1} parent=28 // pred_check_branch
          %2689 = sbr.rel (0) target = $region33
        $region32: #{offset_predictor.1} parent=28 // pred_region
          loop: start=0, step=1, limit=1
          $region34: #{offset_predictor.1} parent=32 // loop_pre_header
            _
          $region35: #{offset_predictor.1} parent=32 // loop_header
            %s2691 = sphi 0, %s2695
            %p2692 = scmp.ge.s32.totalorder %s2691, 1
            %s2696 = sphi [#allocation2], [#allocation2]
            %s2697 = sphi %s5, %s5
          $region36: #{offset_predictor.1} parent=32 // loop_header_branch
            %2694 = sbr.rel (%p2692) target = $region40
          $region37: #{offset_predictor.1} parent=32 // loop_body
            %v2698 = vld [vmem:[%s2696] sm:$0xff]
            %2699 = vst [vmem:[%s2697] sm:$0xff] %v2698
            %v2700 = vld [vmem:[%s2696 + $0x8] sm:$0xff]
            %2701 = vst [vmem:[%s2697 + $0x8] sm:$0xff] %v2700
            %v2702 = vld [vmem:[%s2696 + $0x10] sm:$0xff]
            %2703 = vst [vmem:[%s2697 + $0x10] sm:$0xff] %v2702
          $region38: #{offset_predictor.1} parent=32 // loop_footer
            %s2695 = sadd.s32 1, %s2691
          $region39: #{offset_predictor.1} parent=32 // loop_footer_branch
            %2690 = sbr.rel target = $region35
          $region40: #{offset_predictor.1} parent=32 // loop_exit
            _
        $region33: #{offset_predictor.1} parent=28 // pred_fallthru
          _
        // Predicated region
        $region41: #{offset_predictor.1} parent=28 // pred_check
          _
        $region42: #{offset_predictor.1} parent=28 // pred_check_branch
          %2705 = sbr.rel target = $region44
        $region43: #{offset_predictor.1} parent=28 // pred_region
          _
        $region44: #{offset_predictor.1} parent=28 // pred_fallthru
          _
      $region29: #{offset_predictor.1} parent=24 // pred_fallthru
        _
      %2706 = vnop
    $region25: #{offset_predictor.1} parent=1 // pred_fallthru
      _
    // Predicated region
    $region45: #{offset_predictor.1} parent=1 // pred_check
      _
    $region46: #{offset_predictor.1} parent=1 // pred_check_branch
      %2708 = sbr.rel (0) target = $region48
    $region47: #{offset_predictor.1} parent=1 // pred_region
      _
    $region48: #{offset_predictor.1} parent=1 // pred_fallthru
      _

</llo_original>
